<compile_context>
chip_gen: v7x
topology: tpu7x:2x2x1
jax: 0.10.0
libtpu: 0.0.40
codegen_flags: <defaults>
</compile_context>

<pallas_src>
import functools

import jax
import jax.numpy as jnp
from jax.experimental import pallas as pl
from jax.experimental.pallas import tpu as pltpu

BN_EPS = 1e-5
LANE = 128
SUBLANE = 8


def _round_up(x, m):
    return (x + m - 1) // m * m


# ---------------------------------------------------------------------------
# Pass 1a (small-K / recompute path): conv GEMM -> per-channel sum / sum-sq.
# The GEMM result never leaves VMEM; only the (8, Cp) stats block is written,
# once per core, at the end of its M-tile range.
# ---------------------------------------------------------------------------
def conv_stats_kernel(p_ref, w_ref, stats_ref, acc_ref):
    t = pl.program_id(1)

    @pl.when(t == 0)
    def _():
        acc_ref[...] = jnp.zeros_like(acc_ref)

    y = jnp.dot(p_ref[...], w_ref[...], preferred_element_type=jnp.float32)
    acc_ref[0:1, :] += jnp.sum(y, axis=0, keepdims=True)
    acc_ref[1:2, :] += jnp.sum(y * y, axis=0, keepdims=True)

    @pl.when(t == pl.num_programs(1) - 1)
    def _():
        stats_ref[...] = acc_ref[...].reshape(stats_ref.shape)


# ---------------------------------------------------------------------------
# Pass 1b (large-K / store-y path): as above but also stores the conv output
# as bf16 (half the intermediate HBM traffic vs f32).
# ---------------------------------------------------------------------------
def conv_store_stats_kernel(p_ref, w_ref, y_ref, stats_ref, acc_ref):
    t = pl.program_id(1)

    @pl.when(t == 0)
    def _():
        acc_ref[...] = jnp.zeros_like(acc_ref)

    y = jnp.dot(p_ref[...], w_ref[...], preferred_element_type=jnp.float32)
    y_ref[...] = y.astype(y_ref.dtype)
    acc_ref[0:1, :] += jnp.sum(y, axis=0, keepdims=True)
    acc_ref[1:2, :] += jnp.sum(y * y, axis=0, keepdims=True)

    @pl.when(t == pl.num_programs(1) - 1)
    def _():
        stats_ref[...] = acc_ref[...].reshape(stats_ref.shape)


# ---------------------------------------------------------------------------
# Pass 2a (recompute path): redo the conv GEMM and fuse the BN affine + ReLU
# in the epilogue (per-channel scale/shift, one FMA + max).  No y intermediate.
# Note: scale/shift are applied in the f32 epilogue (rather than folding scale
# into bf16 weights) - same byte count, better accuracy, weight array reused.
# ---------------------------------------------------------------------------
def conv_bn_relu_kernel(p_ref, w_ref, scale_ref, shift_ref, o_ref):
    y = jnp.dot(p_ref[...], w_ref[...], preferred_element_type=jnp.float32)
    o_ref[...] = jnp.maximum(y * scale_ref[...] + shift_ref[...], 0.0)


# ---------------------------------------------------------------------------
# Pass 2b (store-y path): streaming BN affine + ReLU over the bf16 conv output.
# ---------------------------------------------------------------------------
def bn_relu_kernel(y_ref, scale_ref, shift_ref, o_ref):
    y = y_ref[...].astype(jnp.float32)
    o_ref[...] = jnp.maximum(y * scale_ref[...] + shift_ref[...], 0.0)


def _im2col_nhwc_bf16(x_nhwc, kh, kw, stride, padding, m_pad):
    """bf16 im2col patches [m_pad, kh*kw*Cin] (glue; static slicing only)."""
    x = jnp.pad(x_nhwc.astype(jnp.bfloat16),
                ((0, 0), (padding, padding), (padding, padding), (0, 0)))
    n, hp, wp, c = x.shape
    ho = (hp - kh) // stride + 1
    wo = (wp - kw) // stride + 1
    cols = []
    for i in range(kh):
        for j in range(kw):
            cols.append(x[:, i:i + ho * stride:stride, j:j + wo * stride:stride, :])
    patches = jnp.stack(cols, axis=3).reshape(n * ho * wo, kh * kw * c)
    return jnp.pad(patches, ((0, m_pad - n * ho * wo), (0, 0)))


def _pick_tiles(m_rows, k, c_pad, n_split, store_y):
    """Pick the pass-1 M tile from a per-generation VMEM budget."""
    try:
        vmem_cap = pltpu.get_tpu_info().vmem_capacity_bytes
    except Exception:  # query unavailable at trace time -> assume smallest (v7x)
        vmem_cap = 64 * 1024 * 1024
    # Stay well under the scoped-VMEM budget on every generation (v7x: 64 MiB).
    budget = min(max(vmem_cap // 3, 16 * 1024 * 1024), 28 * 1024 * 1024)
    # weight double-buffer + stats scratch + stats output (all tiny).
    fixed = 2 * k * c_pad * 2 + 3 * SUBLANE * c_pad * 4
    out_bytes = 2 if store_y else 4  # bf16 y intermediate vs f32 final output
    # patches double-buffer + output double-buffer + one f32 GEMM temporary.
    per_row = 2 * k * 2 + 2 * c_pad * out_bytes + c_pad * 4
    tm = (budget - fixed) // per_row
    tm = max(256, (tm // 256) * 256)          # 256-row granularity, min 256
    rows_per_core = -(-m_rows // n_split)
    tm = min(tm, _round_up(rows_per_core, 256), 2048)
    est = fixed + tm * per_row
    vmem_limit = int(min(vmem_cap * 3 // 4,
                         max(32 * 1024 * 1024, est + 8 * 1024 * 1024)))
    return tm, vmem_limit


@functools.partial(jax.jit, static_argnames=("stride", "padding", "mode"))
def conv_layer_forward(x_nchw, weight, gamma, beta, *, stride=1, padding=0,
                       mode="auto"):
    """ConvLayer forward (groups=1, IN=False). x: [N,Cin,H,W]; weight: [Cout,Cin,kh,kw]."""
    c_out, c_in, kh, kw = weight.shape
    n, _, h, w_in = x_nchw.shape
    ho = (h + 2 * padding - kh) // stride + 1
    wo = (w_in + 2 * padding - kw) // stride + 1
    m = n * ho * wo
    k = kh * kw * c_in

    # Lane-dense Cout (256-aligned above 128 for the 256x256 MXUs on v6e/v7x).
    c_out_pad = LANE if c_out <= LANE else _round_up(c_out, 2 * LANE)

    # Small K: never materialize the conv output; recompute the GEMM in pass 2.
    use_recompute = (mode == "recompute") or (mode == "auto" and k < 2 * c_out_pad)

    # 2-way split of the M axis -> per-core partial stats (2 TCs on v7x).
    n_split = 2 if m >= 512 else 1
    tm, vmem_limit = _pick_tiles(m, k, c_out_pad, n_split,
                                 store_y=not use_recompute)
    tiles_per_core = pl.cdiv(m, tm * n_split)
    n_tiles = n_split * tiles_per_core
    m_pad = tm * n_tiles

    # bf16 im2col at its final padded M shape; K left unpadded in HBM.
    x_nhwc = jnp.transpose(x_nchw, (0, 2, 3, 1))
    patches = _im2col_nhwc_bf16(x_nhwc, kh, kw, stride, padding, m_pad)

    # Conv weight in GEMM form [K, Cout_pad], bf16 (zero cols for padded Cout).
    w2d = jnp.transpose(weight, (2, 3, 1, 0)).reshape(k, c_out)
    w2d_p = jnp.pad(w2d.astype(jnp.bfloat16), ((0, 0), (0, c_out_pad - c_out)))

    p_spec = pl.BlockSpec((tm, k), lambda c, t: (c * tiles_per_core + t, 0))
    w_spec = pl.BlockSpec((k, c_out_pad), lambda c, t: (0, 0))        # resident
    stats_spec = pl.BlockSpec((1, SUBLANE, c_out_pad), lambda c, t: (c, 0, 0))
    stats_shape = jax.ShapeDtypeStruct((n_split, SUBLANE, c_out_pad), jnp.float32)
    scratch = [pltpu.VMEM((SUBLANE, c_out_pad), jnp.float32)]
    pass1_params = pltpu.CompilerParams(
        dimension_semantics=("parallel", "arbitrary"),
        vmem_limit_bytes=vmem_limit)

    if use_recompute:
        stats = pl.pallas_call(
            conv_stats_kernel,
            out_shape=stats_shape,
            grid=(n_split, tiles_per_core),
            in_specs=[p_spec, w_spec],
            out_specs=stats_spec,
            scratch_shapes=scratch,
            compiler_params=pass1_params,
        )(patches, w2d_p)
        y2d = None
    else:
        y2d, stats = pl.pallas_call(
            conv_store_stats_kernel,
            out_shape=(jax.ShapeDtypeStruct((m_pad, c_out_pad), jnp.bfloat16),
                       stats_shape),
            grid=(n_split, tiles_per_core),
            in_specs=[p_spec, w_spec],
            out_specs=(pl.BlockSpec((tm, c_out_pad),
                                    lambda c, t: (c * tiles_per_core + t, 0)),
                       stats_spec),
            scratch_shapes=scratch,
            compiler_params=pass1_params,
        )(patches, w2d_p)

    # Finalize BN (tiny glue): combine per-core partials, biased variance,
    # fold into per-channel scale/shift.  Padded channels -> scale=shift=0.
    # TODO(synk): switch to per-tile (count, mean, M2) partials if |mean|>>std
    #             catastrophic cancellation ever becomes a concern at huge M.
    m_f = jnp.float32(m)
    s_sum = jnp.sum(stats[:, 0, :], axis=0)
    s_sq = jnp.sum(stats[:, 1, :], axis=0)
    mean = s_sum / m_f
    var = jnp.maximum(s_sq / m_f - mean * mean, 0.0)
    gamma_p = jnp.pad(gamma.astype(jnp.float32), (0, c_out_pad - c_out))
    beta_p = jnp.pad(beta.astype(jnp.float32), (0, c_out_pad - c_out))
    scale = gamma_p * jax.lax.rsqrt(var + BN_EPS)
    shift = beta_p - mean * scale
    scale2d = scale.reshape(1, c_out_pad)
    shift2d = shift.reshape(1, c_out_pad)

    if use_recompute:
        # Pass 2a: GEMM + BN affine + ReLU fused, fully "parallel" over M tiles
        # (megacore shards this axis across the 2 TCs on v7x).
        out2d = pl.pallas_call(
            conv_bn_relu_kernel,
            out_shape=jax.ShapeDtypeStruct((m_pad, c_out_pad), jnp.float32),
            grid=(n_tiles,),
            in_specs=[
                pl.BlockSpec((tm, k), lambda i: (i, 0)),
                pl.BlockSpec((k, c_out_pad), lambda i: (0, 0)),
                pl.BlockSpec((1, c_out_pad), lambda i: (0, 0)),
                pl.BlockSpec((1, c_out_pad), lambda i: (0, 0)),
            ],
            out_specs=pl.BlockSpec((tm, c_out_pad), lambda i: (i, 0)),
            compiler_params=pltpu.CompilerParams(
                dimension_semantics=("parallel",),
                vmem_limit_bytes=vmem_limit),
        )(patches, w2d_p, scale2d, shift2d)
    else:
        # Pass 2b: streaming BN affine + ReLU over the bf16 intermediate, with
        # a larger M tile than pass 1 (streaming wants >=512 rows for roofline).
        g = 1
        for cand in range(n_tiles, 0, -1):
            if n_tiles % cand == 0 and tm * cand <= 2048:
                g = cand
                break
        tm2 = tm * g
        out2d = pl.pallas_call(
            bn_relu_kernel,
            out_shape=jax.ShapeDtypeStruct((m_pad, c_out_pad), jnp.float32),
            grid=(m_pad // tm2,),
            in_specs=[
                pl.BlockSpec((tm2, c_out_pad), lambda i: (i, 0)),
                pl.BlockSpec((1, c_out_pad), lambda i: (0, 0)),
                pl.BlockSpec((1, c_out_pad), lambda i: (0, 0)),
            ],
            out_specs=pl.BlockSpec((tm2, c_out_pad), lambda i: (i, 0)),
            compiler_params=pltpu.CompilerParams(
                dimension_semantics=("parallel",)),
        )(y2d, scale2d, shift2d)

    # [M, Cout] -> [N, Ho, Wo, Cout] -> NCHW (module contract).
    # TODO(synk): skip this transpose (one full HBM pass) if the consumer can
    #             take NHWC, or fuse it into the next layer's im2col.
    out_nhwc = out2d[:m, :c_out].reshape(n, ho, wo, c_out)
    return jnp.transpose(out_nhwc, (0, 3, 1, 2))


def _reference_forward(x, weight, gamma, beta, stride, padding):
    """Pure-JAX f32 reference: Conv2d(bias=False) + BN(train stats) + ReLU."""
    y = jax.lax.conv_general_dilated(
        x, weight, window_strides=(stride, stride),
        padding=[(padding, padding), (padding, padding)],
        dimension_numbers=("NCHW", "OIHW", "NCHW"))
    mean = jnp.mean(y, axis=(0, 2, 3), keepdims=True)
    var = jnp.mean((y - mean) ** 2, axis=(0, 2, 3), keepdims=True)
    y = (y - mean) * jax.lax.rsqrt(var + BN_EPS)
    y = y * gamma.reshape(1, -1, 1, 1) + beta.reshape(1, -1, 1, 1)
    return jnp.maximum(y, 0.0)


if __name__ == "__main__":
    # Module config: ConvLayer(4, 8, 3, stride=1, padding=1)
    in_channels, out_channels, kernel_size, stride, padding = 4, 8, 3, 1, 1
    N, H, W = 2, 16, 16

    key = jax.random.PRNGKey(0)
    kx, kw_key = jax.random.split(key)

    x = jax.random.normal(kx, (N, in_channels, H, W), dtype=jnp.float32)

    # Conv2d weight [Cout, Cin, kh, kw], kaiming-uniform-like deterministic init.
    fan_in = in_channels * kernel_size * kernel_size
    bound = (1.0 / fan_in) ** 0.5
    weight = jax.random.uniform(
        kw_key, (out_channels, in_channels, kernel_size, kernel_size),
        minval=-bound, maxval=bound, dtype=jnp.float32)

    # BatchNorm2d affine params at PyTorch init: weight=1, bias=0.
    gamma = jnp.ones((out_channels,), dtype=jnp.float32)
    beta = jnp.zeros((out_channels,), dtype=jnp.float32)

    ref = _reference_forward(x, weight, gamma, beta, stride, padding)

    # Exercise both code paths: "auto" -> recompute (K=36 < 2*128) and the
    # explicit store-y path.  bf16 GEMM inputs / bf16 intermediate -> loose tol.
    for mode in ("auto", "store_y"):
        out = conv_layer_forward(x, weight, gamma, beta,
                                 stride=stride, padding=padding, mode=mode)
        out = jax.block_until_ready(out)
        assert out.shape == (N, out_channels, H, W), (mode, out.shape)
        assert bool(jnp.all(out >= 0.0)), f"ReLU output must be non-negative ({mode})"
        max_err = float(jnp.max(jnp.abs(out - ref)))
        assert max_err < 6e-2, f"mode={mode}: max abs error {max_err} too large"

    print("KERNEL_OK")
</pallas_src>

<mosaic_0001>
module attributes {stable_mosaic.version = 11 : i64} {
  func.func @conv_stats_kernel(%arg0: i32, %arg1: i32, %arg2: memref<256x36xbf16, #tpu.memory_space<vmem>>, %arg3: memref<36x128xbf16, #tpu.memory_space<vmem>>, %arg4: memref<1x8x128xf32, #tpu.memory_space<vmem>>, %arg5: memref<8x128xf32, #tpu.memory_space<vmem>>) attributes {dimension_semantics = [#tpu.dimension_semantics<parallel>, #tpu.dimension_semantics<arbitrary>], iteration_bounds = array<i64: 2, 1>, scalar_prefetch = 0 : i64, scratch_operands = 1 : i64, tpu.core_type = #tpu.core_type<tc>, window_params = [{transform_indices = @transform_0, window_bounds = array<i64: 256, 36>}, {pipeline_mode = #tpu.pipeline_mode<synchronous>, transform_indices = @transform_1, window_bounds = array<i64: 36, 128>}, {transform_indices = @transform_2, window_bounds = array<i64: 1, 8, 128>}]} {
    %c0_i32 = arith.constant 0 : i32
    %0 = arith.cmpi eq, %arg1, %c0_i32 : i32
    %1 = arith.extui %0 : i1 to i32
    %c0_i32_0 = arith.constant 0 : i32
    %2 = arith.cmpi ne, %1, %c0_i32_0 : i32
    scf.if %2 {
      %cst_15 = arith.constant 0.000000e+00 : f32
      %20 = vector.broadcast %cst_15 : f32 to vector<8x128xf32>
      %c0_16 = arith.constant 0 : index
      %c0_17 = arith.constant 0 : index
      %21 = vector.load %arg5[%c0_16, %c0_17] : memref<8x128xf32, #tpu.memory_space<vmem>>, vector<8x128xf32>
      tpu.vector_store %arg5[%c0_16, %c0_17], %20 {strides = array<i32>} : memref<8x128xf32, #tpu.memory_space<vmem>>, vector<8x128xf32>,
    } else {
    }
    %c0 = arith.constant 0 : index
    %c0_1 = arith.constant 0 : index
    %3 = vector.load %arg2[%c0, %c0_1] : memref<256x36xbf16, #tpu.memory_space<vmem>>, vector<256x36xbf16>
    %c0_2 = arith.constant 0 : index
    %c0_3 = arith.constant 0 : index
    %4 = vector.load %arg3[%c0_2, %c0_3] : memref<36x128xbf16, #tpu.memory_space<vmem>>, vector<36x128xbf16>
    %cst = arith.constant dense<0.000000e+00> : vector<256x128xf32>
    %5 = tpu.matmul %3, %4, %cst {dimension_numbers = #tpu.dot_dimension_numbers<[1], [0], [0], [1], [0, 0, 1, 1], [], []>} : vector<256x36xbf16>, vector<36x128xbf16>, vector<256x128xf32> -> vector<256x128xf32>
    %c0_4 = arith.constant 0 : index
    %c0_5 = arith.constant 0 : index
    %6 = vector.load %arg5[%c0_4, %c0_5] : memref<8x128xf32, #tpu.memory_space<vmem>>, vector<1x128xf32>
    %cst_6 = arith.constant dense<0.000000e+00> : vector<128xf32>
    %7 = vector.multi_reduction <add>, %5, %cst_6 [0] : vector<256x128xf32> to vector<128xf32>
    %8 = vector.shape_cast %7 : vector<128xf32> to vector<1x128xf32>
    %9 = arith.addf %6, %8 : vector<1x128xf32>
    %c0_7 = arith.constant 0 : index
    %c0_8 = arith.constant 0 : index
    %10 = vector.load %arg5[%c0_7, %c0_8] : memref<8x128xf32, #tpu.memory_space<vmem>>, vector<1x128xf32>
    tpu.vector_store %arg5[%c0_7, %c0_8], %9 {strides = array<i32>} : memref<8x128xf32, #tpu.memory_space<vmem>>, vector<1x128xf32>,
    %c1 = arith.constant 1 : index
    %c0_9 = arith.constant 0 : index
    %11 = vector.load %arg5[%c1, %c0_9] : memref<8x128xf32, #tpu.memory_space<vmem>>, vector<1x128xf32>
    %12 = arith.mulf %5, %5 : vector<256x128xf32>
    %cst_10 = arith.constant dense<0.000000e+00> : vector<128xf32>
    %13 = vector.multi_reduction <add>, %12, %cst_10 [0] : vector<256x128xf32> to vector<128xf32>
    %14 = vector.shape_cast %13 : vector<128xf32> to vector<1x128xf32>
    %15 = arith.addf %11, %14 : vector<1x128xf32>
    %c1_11 = arith.constant 1 : index
    %c0_12 = arith.constant 0 : index
    %16 = vector.load %arg5[%c1_11, %c0_12] : memref<8x128xf32, #tpu.memory_space<vmem>>, vector<1x128xf32>
    tpu.vector_store %arg5[%c1_11, %c0_12], %15 {strides = array<i32>} : memref<8x128xf32, #tpu.memory_space<vmem>>, vector<1x128xf32>,
    %c0_i32_13 = arith.constant 0 : i32
    %17 = arith.cmpi eq, %arg1, %c0_i32_13 : i32
    %18 = arith.extui %17 : i1 to i32
    %c0_i32_14 = arith.constant 0 : i32
    %19 = arith.cmpi ne, %18, %c0_i32_14 : i32
    scf.if %19 {
      %c0_15 = arith.constant 0 : index
      %c0_16 = arith.constant 0 : index
      %20 = vector.load %arg5[%c0_15, %c0_16] : memref<8x128xf32, #tpu.memory_space<vmem>>, vector<8x128xf32>
      %21 = vector.shape_cast %20 : vector<8x128xf32> to vector<1x8x128xf32>
      %c0_17 = arith.constant 0 : index
      %c0_18 = arith.constant 0 : index
      %c0_19 = arith.constant 0 : index
      %22 = vector.load %arg4[%c0_17, %c0_18, %c0_19] : memref<1x8x128xf32, #tpu.memory_space<vmem>>, vector<1x8x128xf32>
      tpu.vector_store %arg4[%c0_17, %c0_18, %c0_19], %21 {strides = array<i32>} : memref<1x8x128xf32, #tpu.memory_space<vmem>>, vector<1x8x128xf32>,
    } else {
    }
    return
  }
  func.func @transform_0(%arg0: i32, %arg1: i32) -> (i32, i32) {
    %c1_i32 = arith.constant 1 : i32
    %0 = arith.muli %arg0, %c1_i32 : i32
    %1 = arith.addi %0, %arg1 : i32
    %c0_i32 = arith.constant 0 : i32
    %c0_i32_0 = arith.constant 0 : i32
    return %1, %c0_i32 : i32, i32
  }
  func.func @transform_1(%arg0: i32, %arg1: i32) -> (i32, i32) {
    %c0_i32 = arith.constant 0 : i32
    %c0_i32_0 = arith.constant 0 : i32
    %c0_i32_1 = arith.constant 0 : i32
    return %c0_i32, %c0_i32_0 : i32, i32
  }
  func.func @transform_2(%arg0: i32, %arg1: i32) -> (i32, i32, i32) {
    %c0_i32 = arith.constant 0 : i32
    %c0_i32_0 = arith.constant 0 : i32
    %c0_i32_1 = arith.constant 0 : i32
    return %arg0, %c0_i32, %c0_i32_0 : i32, i32, i32
  }
}

module attributes {stable_mosaic.version = 11 : i64} {
  func.func @conv_bn_relu_kernel(%arg0: i32, %arg1: memref<256x36xbf16, #tpu.memory_space<vmem>>, %arg2: memref<36x128xbf16, #tpu.memory_space<vmem>>, %arg3: memref<1x128xf32, #tpu.memory_space<vmem>>, %arg4: memref<1x128xf32, #tpu.memory_space<vmem>>, %arg5: memref<256x128xf32, #tpu.memory_space<vmem>>) attributes {dimension_semantics = [#tpu.dimension_semantics<parallel>], iteration_bounds = array<i64: 2>, scalar_prefetch = 0 : i64, scratch_operands = 0 : i64, tpu.core_type = #tpu.core_type<tc>, window_params = [{transform_indices = @transform_0, window_bounds = array<i64: 256, 36>}, {pipeline_mode = #tpu.pipeline_mode<synchronous>, transform_indices = @transform_1, window_bounds = array<i64: 36, 128>}, {pipeline_mode = #tpu.pipeline_mode<synchronous>, transform_indices = @transform_2, window_bounds = array<i64: 1, 128>}, {pipeline_mode = #tpu.pipeline_mode<synchronous>, transform_indices = @transform_3, window_bounds = array<i64: 1, 128>}, {transform_indices = @transform_4, window_bounds = array<i64: 256, 128>}]} {
    %c0 = arith.constant 0 : index
    %c0_0 = arith.constant 0 : index
    %0 = vector.load %arg1[%c0, %c0_0] : memref<256x36xbf16, #tpu.memory_space<vmem>>, vector<256x36xbf16>
    %c0_1 = arith.constant 0 : index
    %c0_2 = arith.constant 0 : index
    %1 = vector.load %arg2[%c0_1, %c0_2] : memref<36x128xbf16, #tpu.memory_space<vmem>>, vector<36x128xbf16>
    %cst = arith.constant dense<0.000000e+00> : vector<256x128xf32>
    %2 = tpu.matmul %0, %1, %cst {dimension_numbers = #tpu.dot_dimension_numbers<[1], [0], [0], [1], [0, 0, 1, 1], [], []>} : vector<256x36xbf16>, vector<36x128xbf16>, vector<256x128xf32> -> vector<256x128xf32>
    %c0_3 = arith.constant 0 : index
    %c0_4 = arith.constant 0 : index
    %3 = vector.load %arg3[%c0_3, %c0_4] : memref<1x128xf32, #tpu.memory_space<vmem>>, vector<1x128xf32>
    %4 = vector.broadcast %3 : vector<1x128xf32> to vector<256x128xf32>
    %5 = arith.mulf %2, %4 : vector<256x128xf32>
    %c0_5 = arith.constant 0 : index
    %c0_6 = arith.constant 0 : index
    %6 = vector.load %arg4[%c0_5, %c0_6] : memref<1x128xf32, #tpu.memory_space<vmem>>, vector<1x128xf32>
    %7 = vector.broadcast %6 : vector<1x128xf32> to vector<256x128xf32>
    %8 = arith.addf %5, %7 : vector<256x128xf32>
    %cst_7 = arith.constant 0.000000e+00 : f32
    %9 = vector.broadcast %cst_7 : f32 to vector<256x128xf32>
    %10 = arith.maximumf %8, %9 : vector<256x128xf32>
    %c0_8 = arith.constant 0 : index
    %c0_9 = arith.constant 0 : index
    %11 = vector.load %arg5[%c0_8, %c0_9] : memref<256x128xf32, #tpu.memory_space<vmem>>, vector<256x128xf32>
    tpu.vector_store %arg5[%c0_8, %c0_9], %10 {strides = array<i32>} : memref<256x128xf32, #tpu.memory_space<vmem>>, vector<256x128xf32>,
    return
  }
  func.func @transform_0(%arg0: i32) -> (i32, i32) {
    %c0_i32 = arith.constant 0 : i32
    %c0_i32_0 = arith.constant 0 : i32
    return %arg0, %c0_i32 : i32, i32
  }
  func.func @transform_1(%arg0: i32) -> (i32, i32) {
    %c0_i32 = arith.constant 0 : i32
    %c0_i32_0 = arith.constant 0 : i32
    %c0_i32_1 = arith.constant 0 : i32
    return %c0_i32, %c0_i32_0 : i32, i32
  }
  func.func @transform_2(%arg0: i32) -> (i32, i32) {
    %c0_i32 = arith.constant 0 : i32
    %c0_i32_0 = arith.constant 0 : i32
    %c0_i32_1 = arith.constant 0 : i32
    return %c0_i32, %c0_i32_0 : i32, i32
  }
  func.func @transform_3(%arg0: i32) -> (i32, i32) {
    %c0_i32 = arith.constant 0 : i32
    %c0_i32_0 = arith.constant 0 : i32
    %c0_i32_1 = arith.constant 0 : i32
    return %c0_i32, %c0_i32_0 : i32, i32
  }
  func.func @transform_4(%arg0: i32) -> (i32, i32) {
    %c0_i32 = arith.constant 0 : i32
    %c0_i32_0 = arith.constant 0 : i32
    return %arg0, %c0_i32 : i32, i32
  }
}

</mosaic_0001>

<llo_original>
// kernel: conv_layer_forward.3
$region0: #{conv_layer_forward.3}
  #allocation0 [shape = 'u32[]', space=smem, size = 0x4, offset = 0x4, fixed_abs, tag = 'smem constant byte address 0x4 - core index']
  #allocation1 [shape = 'u32[144,128]{1,0:T(1,128)}', space=vmem, size = 0x12000, scoped, tag = 'internal scratch']
  %s0 = inlined_call_operand.vmem [shape: bf16[512,36], index: 0, kind: input, shape index: {}]
  %s1 = inlined_call_operand.vmem [shape: bf16[36,128], index: 1, kind: input, shape index: {}]
  %s2 = inlined_call_operand.vmem [shape: f32[1,128], index: 2, kind: input, shape index: {}]
  %s3 = inlined_call_operand.vmem [shape: f32[1,128], index: 3, kind: input, shape index: {}]
  %s4 = inlined_call_operand.vmem [shape: f32[512,128], index: 4, kind: output, shape index: {}]
  %s5 = sld [smem:[#allocation0]]
  $region49: #{conv_layer_forward.3} parent=0
    _
  %s7 = ssub.s32 1, %s5
  %s8 = scalar_select 0, %s7, %s5
  loop: start=0, step=1, limit=4
  $region2: #{conv_layer_forward.3} parent=0 // loop_pre_header
    _
  $region3: #{conv_layer_forward.3} parent=0 // loop_header
    %s10 = sphi 0, %s14
    %p11 = scmp.ge.s32.totalorder %s10, 4
    %s20 = sphi 0, %s22
    %s23 = sphi 0, %s20
    %s24 = sphi 0, %s23
    %s40 = sphi 0, %s24
    %s44 = sphi 0, %s44
    %s46 = sphi 0, %s44
    %s47 = sphi 0, %s46
    %s61 = sphi 0, %s47
    %s65 = sphi 0, %s65
    %s67 = sphi 0, %s65
    %s68 = sphi 0, %s67
    %s82 = sphi 0, %s68
    %s86 = sphi 0, %s86
    %s88 = sphi 0, %s86
    %s89 = sphi 0, %s88
    %s103 = sphi 0, %s89
    %s109 = sphi 0, %s111
    %s112 = sphi 0, %s109
    %s113 = sphi 0, %s112
    %s129 = sphi 0, %s113
  $region4: #{conv_layer_forward.3} parent=0 // loop_header_branch
    %13 = sbr.rel (%p11) target = $region8
  $region5: #{conv_layer_forward.3} parent=0 // loop_body
    %s15 = ssub.s32 %s10, 1
    %s16 = ssub.s32 %s10, 2
    %s17 = sadd.s32 %s10, 1
    %s18 = ssub.s32 %s10, %s17
    %p19 = scmp.eq.s32.totalorder %s18, 0
    %s21 = sadd.s32 %s20, 1
    %s22 = scalar_select %p19, %s20, %s21
    %p25 = pneg %p19
    %p26 = scmp.eq.s32.totalorder %s10, 1
    %p27 = por %p25, %p26
    %p28 = scmp.ne.s32.totalorder %s20, %s23
    %p29 = scmp.eq.s32.totalorder %s10, 0
    %p30 = por %p28, %p29
    %p31 = scmp.ne.s32.totalorder %s20, %s23
    %p32 = scmp.eq.s32.totalorder %s15, 1
    %p33 = por %p31, %p32
    %p34 = scmp.ne.s32.totalorder %s23, %s24
    %p35 = scmp.eq.s32.totalorder %s15, 0
    %p36 = por %p34, %p35
    %p37 = scmp.ne.s32.totalorder %s23, %s24
    %p38 = scmp.eq.s32.totalorder %s16, 1
    %p39 = por %p37, %p38
    %p41 = scmp.ne.s32.totalorder %s24, %s40
    %p42 = scmp.eq.s32.totalorder %s16, 0
    %p43 = por %p41, %p42
    %s45 = sadd.s32 %s44, 1
    %p48 = scmp.eq.s32.totalorder %s10, 1
    %p49 = scmp.ne.s32.totalorder %s44, %s46
    %p50 = scmp.eq.s32.totalorder %s10, 0
    %p51 = por %p49, %p50
    %p52 = scmp.ne.s32.totalorder %s44, %s46
    %p53 = scmp.eq.s32.totalorder %s15, 1
    %p54 = por %p52, %p53
    %p55 = scmp.ne.s32.totalorder %s46, %s47
    %p56 = scmp.eq.s32.totalorder %s15, 0
    %p57 = por %p55, %p56
    %p58 = scmp.ne.s32.totalorder %s46, %s47
    %p59 = scmp.eq.s32.totalorder %s16, 1
    %p60 = por %p58, %p59
    %p62 = scmp.ne.s32.totalorder %s47, %s61
    %p63 = scmp.eq.s32.totalorder %s16, 0
    %p64 = por %p62, %p63
    %s66 = sadd.s32 %s65, 1
    %p69 = scmp.eq.s32.totalorder %s10, 1
    %p70 = scmp.ne.s32.totalorder %s65, %s67
    %p71 = scmp.eq.s32.totalorder %s10, 0
    %p72 = por %p70, %p71
    %p73 = scmp.ne.s32.totalorder %s65, %s67
    %p74 = scmp.eq.s32.totalorder %s15, 1
    %p75 = por %p73, %p74
    %p76 = scmp.ne.s32.totalorder %s67, %s68
    %p77 = scmp.eq.s32.totalorder %s15, 0
    %p78 = por %p76, %p77
    %p79 = scmp.ne.s32.totalorder %s67, %s68
    %p80 = scmp.eq.s32.totalorder %s16, 1
    %p81 = por %p79, %p80
    %p83 = scmp.ne.s32.totalorder %s68, %s82
    %p84 = scmp.eq.s32.totalorder %s16, 0
    %p85 = por %p83, %p84
    %s87 = sadd.s32 %s86, 1
    %p90 = scmp.eq.s32.totalorder %s10, 1
    %p91 = scmp.ne.s32.totalorder %s86, %s88
    %p92 = scmp.eq.s32.totalorder %s10, 0
    %p93 = por %p91, %p92
    %p94 = scmp.ne.s32.totalorder %s86, %s88
    %p95 = scmp.eq.s32.totalorder %s15, 1
    %p96 = por %p94, %p95
    %p97 = scmp.ne.s32.totalorder %s88, %s89
    %p98 = scmp.eq.s32.totalorder %s15, 0
    %p99 = por %p97, %p98
    %p100 = scmp.ne.s32.totalorder %s88, %s89
    %p101 = scmp.eq.s32.totalorder %s16, 1
    %p102 = por %p100, %p101
    %p104 = scmp.ne.s32.totalorder %s89, %s103
    %p105 = scmp.eq.s32.totalorder %s16, 0
    %p106 = por %p104, %p105
    %s107 = ssub.s32 %s10, %s17
    %p108 = scmp.eq.s32.totalorder %s107, 0
    %s110 = sadd.s32 %s109, 1
    %s111 = scalar_select %p108, %s109, %s110
    %p114 = pneg %p108
    %p115 = scmp.eq.s32.totalorder %s10, 1
    %p116 = por %p114, %p115
    %p117 = scmp.ne.s32.totalorder %s109, %s112
    %p118 = scmp.eq.s32.totalorder %s10, 0
    %p119 = por %p117, %p118
    %p120 = scmp.ne.s32.totalorder %s109, %s112
    %p121 = scmp.eq.s32.totalorder %s15, 1
    %p122 = por %p120, %p121
    %p123 = scmp.ne.s32.totalorder %s112, %s113
    %p124 = scmp.eq.s32.totalorder %s15, 0
    %p125 = por %p123, %p124
    %p126 = scmp.ne.s32.totalorder %s112, %s113
    %p127 = scmp.eq.s32.totalorder %s16, 1
    %p128 = por %p126, %p127
    %p130 = scmp.ne.s32.totalorder %s113, %s129
    %p131 = scmp.eq.s32.totalorder %s16, 0
    %p132 = por %p130, %p131
    %p133 = scmp.le.s32.totalorder 1, %s10
    %p134 = scmp.lt.s32.totalorder %s10, 3
    %p135 = pnand %p133, %p134
    %p136 = pneg %p135
    // Predicated region
    $region9: #{conv_layer_forward.3} parent=5 // pred_check
      _
    $region10: #{conv_layer_forward.3} parent=5 // pred_check_branch
      %138 = sbr.rel (%p135) target = $region12
    $region11: #{conv_layer_forward.3} parent=5 // pred_region
      %s139 = ssub.s32 %s10, 1
      // Predicated region
      $region13: #{conv_layer_forward.3} parent=11 // pred_check
        %p140 = pneg %p57
      $region14: #{conv_layer_forward.3} parent=11 // pred_check_branch
        %142 = sbr.rel (%p140) target = $region16
      $region15: #{conv_layer_forward.3} parent=11 // pred_region
        _
      $region16: #{conv_layer_forward.3} parent=11 // pred_fallthru
        _
      // Predicated region
      $region17: #{conv_layer_forward.3} parent=11 // pred_check
        %p143 = pneg %p78
      $region18: #{conv_layer_forward.3} parent=11 // pred_check_branch
        %145 = sbr.rel (%p143) target = $region20
      $region19: #{conv_layer_forward.3} parent=11 // pred_region
        _
      $region20: #{conv_layer_forward.3} parent=11 // pred_fallthru
        _
      // Predicated region
      $region21: #{conv_layer_forward.3} parent=11 // pred_check
        %p146 = pneg %p99
      $region22: #{conv_layer_forward.3} parent=11 // pred_check_branch
        %148 = sbr.rel (%p146) target = $region24
      $region23: #{conv_layer_forward.3} parent=11 // pred_region
        _
      $region24: #{conv_layer_forward.3} parent=11 // pred_fallthru
        _
    $region12: #{conv_layer_forward.3} parent=5 // pred_fallthru
      _
    %p149 = scmp.lt.s32.totalorder %s10, 2
    // Predicated region
    $region25: #{conv_layer_forward.3} parent=5 // pred_check
      %p150 = pneg %p149
    $region26: #{conv_layer_forward.3} parent=5 // pred_check_branch
      %152 = sbr.rel (%p150) target = $region28
    $region27: #{conv_layer_forward.3} parent=5 // pred_region
      // Predicated region
      $region29: #{conv_layer_forward.3} parent=27 // pred_check
        %p153 = pneg %p30
      $region30: #{conv_layer_forward.3} parent=27 // pred_check_branch
        %155 = sbr.rel (%p153) target = $region32
      $region31: #{conv_layer_forward.3} parent=27 // pred_region
        %s156 = smul.u32 32, %s10
        %p157 = scmp.lt.s32.totalorder %s156, 63
        %s158 = scalar_select %p157, %s156, 63
        %s159 = smul.addr %s158, 4
        %s160 = scalar_lea.vmem %s0, %s159
        %s161 = smul.u32 32, %s10
      $region32: #{conv_layer_forward.3} parent=27 // pred_fallthru
        _
    $region28: #{conv_layer_forward.3} parent=5 // pred_fallthru
      _
    %p162 = scmp.le.s32.totalorder 1, %s10
    %p163 = scmp.lt.s32.totalorder %s10, 3
    %p164 = pnand %p162, %p163
    %p165 = pneg %p164
    // Predicated region
    $region33: #{conv_layer_forward.3} parent=5 // pred_check
      _
    $region34: #{conv_layer_forward.3} parent=5 // pred_check_branch
      %167 = sbr.rel (%p164) target = $region36
    $region35: #{conv_layer_forward.3} parent=5 // pred_region
      %s168 = ssub.s32 %s10, 1
      %s169 = smul.u32 32, %s15
      %p170 = scmp.lt.s32.totalorder %s169, 63
      %s171 = scalar_select %p170, %s169, 63
      %s172 = smul.addr %s171, 4
      %s173 = scalar_lea.vmem %s0, %s172
      %p174 = pneg %p36
      %p175 = pneg %p33
      %p176 = pneg %p57
      %p177 = pneg %p54
      %p178 = pneg %p78
      %p179 = pneg %p75
      %p180 = pneg %p99
      %p181 = pneg %p96
      %p182 = pneg %p125
      %p183 = pneg %p122
      %s184 = smul.u32 32, %s15
      %p185 = scmp.lt.s32.totalorder %s184, 63
      %s186 = scalar_select %p185, %s184, 63
      %s187 = smul.addr %s186, 8
      %s188 = scalar_lea.vmem %s4, %s187
      %s189 = smul.u32 32, %s15
      %p190 = scmp.lt.s32.totalorder %s189, 63
      %s191 = scalar_select %p190, %s189, 63
      %s192 = smul.addr %s191, 4
      %s193 = scalar_lea.vmem %s0, %s192
      %s194 = smul.u32 32, %s15
      %s195 = smul.u32 32, %s15
      %p196 = scmp.lt.s32.totalorder %s195, 63
      %s197 = scalar_select %p196, %s195, 63
      %s198 = smul.addr %s197, 8
      %s199 = scalar_lea.vmem %s4, %s198
      %s200 = smul.u32 32, %s15
      %v202 = vld [vmem:[%s193] sm:$0xf]
      %v203 = vld [vmem:[%s193 + $0x4] sm:$0xf]
      %v204 = vld [vmem:[%s193 + $0x8] sm:$0xf]
      %v205 = vld [vmem:[%s193 + $0xc] sm:$0xf]
      %v206 = vld [vmem:[%s193 + $0x10] sm:$0xf]
      %v207 = vld [vmem:[%s193 + $0x14] sm:$0xf]
      %v208 = vld [vmem:[%s193 + $0x18] sm:$0xf]
      %v209 = vld [vmem:[%s193 + $0x1c] sm:$0xf]
      %v210 = vld [vmem:[%s193 + $0x20] sm:$0xf]
      %v211 = vld [vmem:[%s193 + $0x24] sm:$0xf]
      %v212 = vld [vmem:[%s193 + $0x28] sm:$0xf]
      %v213 = vld [vmem:[%s193 + $0x2c] sm:$0xf]
      %v214 = vld [vmem:[%s193 + $0x30] sm:$0xf]
      %v215 = vld [vmem:[%s193 + $0x34] sm:$0xf]
      %v216 = vld [vmem:[%s193 + $0x38] sm:$0xf]
      %v217 = vld [vmem:[%s193 + $0x3c] sm:$0xf]
      %v218 = vld [vmem:[%s193 + $0x40] sm:$0xf]
      %v219 = vld [vmem:[%s193 + $0x44] sm:$0xf]
      %v220 = vld [vmem:[%s193 + $0x48] sm:$0xf]
      %v221 = vld [vmem:[%s193 + $0x4c] sm:$0xf]
      %v222 = vld [vmem:[%s193 + $0x50] sm:$0xf]
      %v223 = vld [vmem:[%s193 + $0x54] sm:$0xf]
      %v224 = vld [vmem:[%s193 + $0x58] sm:$0xf]
      %v225 = vld [vmem:[%s193 + $0x5c] sm:$0xf]
      %v226 = vld [vmem:[%s193 + $0x60] sm:$0xf]
      %v227 = vld [vmem:[%s193 + $0x64] sm:$0xf]
      %v228 = vld [vmem:[%s193 + $0x68] sm:$0xf]
      %v229 = vld [vmem:[%s193 + $0x6c] sm:$0xf]
      %v230 = vld [vmem:[%s193 + $0x70] sm:$0xf]
      %v231 = vld [vmem:[%s193 + $0x74] sm:$0xf]
      %v232 = vld [vmem:[%s193 + $0x78] sm:$0xf]
      %v233 = vld [vmem:[%s193 + $0x7c] sm:$0xf]
      %v234 = vld [vmem:[%s1] sm:$0xf]
      %v235 = vld [vmem:[%s1 + $0x4] sm:$0xf]
      %v236 = vld [vmem:[%s1 + $0x8] sm:$0xf]
      %v237 = vld [vmem:[%s1 + $0xc] sm:$0xf]
      %v238 = vld [vmem:[%s1 + $0x10] sm:$0x3]
      %v271 = vunpack.c.l.b16 %v202
      %v272 = vunpack.c.l.b16 %v203
      %v273 = vunpack.c.l.b16 %v204
      %v274 = vunpack.c.l.b16 %v205
      %v275 = vunpack.c.l.b16 %v206
      %v276 = vunpack.c.l.b16 %v207
      %v277 = vunpack.c.l.b16 %v208
      %v278 = vunpack.c.l.b16 %v209
      %v279 = vunpack.c.l.b16 %v210
      %v280 = vunpack.c.l.b16 %v211
      %v281 = vunpack.c.l.b16 %v212
      %v282 = vunpack.c.l.b16 %v213
      %v283 = vunpack.c.l.b16 %v214
      %v284 = vunpack.c.l.b16 %v215
      %v285 = vunpack.c.l.b16 %v216
      %v286 = vunpack.c.l.b16 %v217
      %v287 = vunpack.c.l.b16 %v218
      %v288 = vunpack.c.l.b16 %v219
      %v289 = vunpack.c.l.b16 %v220
      %v290 = vunpack.c.l.b16 %v221
      %v291 = vunpack.c.l.b16 %v222
      %v292 = vunpack.c.l.b16 %v223
      %v293 = vunpack.c.l.b16 %v224
      %v294 = vunpack.c.l.b16 %v225
      %v295 = vunpack.c.l.b16 %v226
      %v296 = vunpack.c.l.b16 %v227
      %v297 = vunpack.c.l.b16 %v228
      %v298 = vunpack.c.l.b16 %v229
      %v299 = vunpack.c.l.b16 %v230
      %v300 = vunpack.c.l.b16 %v231
      %v301 = vunpack.c.l.b16 %v232
      %v302 = vunpack.c.l.b16 %v233
      %v303 = vpack.c.b16 %v272, %v271
      %v304 = vpack.c.b16 %v274, %v273
      %v305 = vpack.c.b16 %v276, %v275
      %v306 = vpack.c.b16 %v278, %v277
      %v307 = vpack.c.b16 %v280, %v279
      %v308 = vpack.c.b16 %v282, %v281
      %v309 = vpack.c.b16 %v284, %v283
      %v310 = vpack.c.b16 %v286, %v285
      %v311 = vpack.c.b16 %v288, %v287
      %v312 = vpack.c.b16 %v290, %v289
      %v313 = vpack.c.b16 %v292, %v291
      %v314 = vpack.c.b16 %v294, %v293
      %v315 = vpack.c.b16 %v296, %v295
      %v316 = vpack.c.b16 %v298, %v297
      %v317 = vpack.c.b16 %v300, %v299
      %v318 = vpack.c.b16 %v302, %v301
      %v324 = vunpack.c.l.b16 %v234
      %v325 = vunpack.c.l.b16 %v235
      %v326 = vunpack.c.l.b16 %v236
      %v327 = vunpack.c.l.b16 %v237
      %v328 = vunpack.c.l.b16 %v238
      %v329 = vpack.c.b16 %v325, %v324
      %v330 = vpack.c.b16 %v327, %v326
      %v331 = vpack.c.b16 %v328, %v328
      %vm334 = vcmask 293888
      %v336 = vsel %vm334, %v303, 0
      %v339 = vsel %vm334, %v304, 0
      %v342 = vsel %vm334, %v305, 0
      %v345 = vsel %vm334, %v306, 0
      %v348 = vsel %vm334, %v307, 0
      %v351 = vsel %vm334, %v308, 0
      %v354 = vsel %vm334, %v309, 0
      %v357 = vsel %vm334, %v310, 0
      %v360 = vsel %vm334, %v311, 0
      %v363 = vsel %vm334, %v312, 0
      %v366 = vsel %vm334, %v313, 0
      %v369 = vsel %vm334, %v314, 0
      %v372 = vsel %vm334, %v315, 0
      %v375 = vsel %vm334, %v316, 0
      %v378 = vsel %vm334, %v317, 0
      %v381 = vsel %vm334, %v318, 0
      %vm383 = vcmask 1041408
      %v385 = vsel %vm383, %v331, 0
      %387 = vmatprep.subr.bf16.mxu0 0
      %388 = vmatpush1.bf16.msra.mxu0 %v329
      %389 = vmatprep.subr.bf16.mxu0 0
      %390 = vmatpush1.bf16.msra.mxu0 %v330
      %391 = vmatprep.subr.bf16.mxu0 0
      %392 = vmatpush1.bf16.msra.mxu0 %v385
      %393 = vmatprep.subr.bf16.mxu0 0
      %394 = vmatpush1.bf16.msra.mxu0 0
      %395 = vmatprep.subr.bf16.mxu0 0
      %396 = vmatpush1.bf16.msra.mxu0 0
      %397 = vmatprep.subr.bf16.mxu0 0
      %398 = vmatpush1.bf16.msra.mxu0 0
      %399 = vmatprep.subr.bf16.mxu0 0
      %400 = vmatpush1.bf16.msra.mxu0 0
      %401 = vmatprep.subr.bf16.mxu0 0
      %402 = vmatpush1.bf16.msra.mxu0 0
      %403 = vmatprep.subr.bf16.mxu0 0
      %404 = vmatpush1.bf16.msra.mxu0 0
      %405 = vmatprep.subr.bf16.mxu0 0
      %406 = vmatpush1.bf16.msra.mxu0 0
      %407 = vmatprep.subr.bf16.mxu0 0
      %408 = vmatpush1.bf16.msra.mxu0 0
      %409 = vmatprep.subr.bf16.mxu0 0
      %410 = vmatpush1.bf16.msra.mxu0 0
      %411 = vmatprep.subr.bf16.mxu0 0
      %412 = vmatpush1.bf16.msra.mxu0 0
      %413 = vmatprep.subr.bf16.mxu0 0
      %414 = vmatpush1.bf16.msra.mxu0 0
      %415 = vmatprep.subr.bf16.mxu0 0
      %416 = vmatpush1.bf16.msra.mxu0 0
      %417 = vmatprep.subr.bf16.mxu0 0
      %418 = vmatpush1.bf16.msra.mxu0 0
      %419 = vmatprep.mubr.bf16.mxu0 0
      %420 = vmatmul.mubr.bf16.gmra.mrb[0].mxu0 %v336
      %v421 = vpop.f32.mrb[0].mxu0
      %v422 = vadd.f32 0.0, %v421
      %v423 = vpop.f32.mrb[0].mxu0
      %v424 = vpop.f32.mrb[0].mxu0
      %v425 = vadd.f32 0.0, %v424
      %v426 = vpop.f32.mrb[0].mxu0
      %427 = vmatprep.mubr.bf16.mxu0 0
      %428 = vmatmul.mubr.bf16.gmra.mrb[0].mxu0 %v339
      %v429 = vpop.f32.mrb[0].mxu0
      %v430 = vadd.f32 0.0, %v429
      %v431 = vpop.f32.mrb[0].mxu0
      %v432 = vpop.f32.mrb[0].mxu0
      %v433 = vadd.f32 0.0, %v432
      %v434 = vpop.f32.mrb[0].mxu0
      %435 = vmatprep.mubr.bf16.mxu0 0
      %436 = vmatmul.mubr.bf16.gmra.mrb[0].mxu0 %v342
      %v437 = vpop.f32.mrb[0].mxu0
      %v438 = vadd.f32 0.0, %v437
      %v439 = vpop.f32.mrb[0].mxu0
      %v440 = vpop.f32.mrb[0].mxu0
      %v441 = vadd.f32 0.0, %v440
      %v442 = vpop.f32.mrb[0].mxu0
      %443 = vmatprep.mubr.bf16.mxu0 0
      %444 = vmatmul.mubr.bf16.gmra.mrb[0].mxu0 %v345
      %v445 = vpop.f32.mrb[0].mxu0
      %v446 = vadd.f32 0.0, %v445
      %v447 = vpop.f32.mrb[0].mxu0
      %v448 = vpop.f32.mrb[0].mxu0
      %v449 = vadd.f32 0.0, %v448
      %v450 = vpop.f32.mrb[0].mxu0
      %451 = vmatprep.mubr.bf16.mxu0 0
      %452 = vmatmul.mubr.bf16.gmra.mrb[0].mxu0 %v348
      %v453 = vpop.f32.mrb[0].mxu0
      %v454 = vadd.f32 0.0, %v453
      %v455 = vpop.f32.mrb[0].mxu0
      %v456 = vpop.f32.mrb[0].mxu0
      %v457 = vadd.f32 0.0, %v456
      %v458 = vpop.f32.mrb[0].mxu0
      %459 = vmatprep.mubr.bf16.mxu0 0
      %460 = vmatmul.mubr.bf16.gmra.mrb[0].mxu0 %v351
      %v461 = vpop.f32.mrb[0].mxu0
      %v462 = vadd.f32 0.0, %v461
      %v463 = vpop.f32.mrb[0].mxu0
      %v464 = vpop.f32.mrb[0].mxu0
      %v465 = vadd.f32 0.0, %v464
      %v466 = vpop.f32.mrb[0].mxu0
      %467 = vmatprep.mubr.bf16.mxu0 0
      %468 = vmatmul.mubr.bf16.gmra.mrb[0].mxu0 %v354
      %v469 = vpop.f32.mrb[0].mxu0
      %v470 = vadd.f32 0.0, %v469
      %v471 = vpop.f32.mrb[0].mxu0
      %v472 = vpop.f32.mrb[0].mxu0
      %v473 = vadd.f32 0.0, %v472
      %v474 = vpop.f32.mrb[0].mxu0
      %475 = vmatprep.mubr.bf16.mxu0 0
      %476 = vmatmul.mubr.bf16.gmra.mrb[0].mxu0 %v357
      %v477 = vpop.f32.mrb[0].mxu0
      %v478 = vadd.f32 0.0, %v477
      %v479 = vpop.f32.mrb[0].mxu0
      %v480 = vpop.f32.mrb[0].mxu0
      %v481 = vadd.f32 0.0, %v480
      %v482 = vpop.f32.mrb[0].mxu0
      %483 = vmatprep.mubr.bf16.mxu0 0
      %484 = vmatmul.mubr.bf16.gmra.mrb[0].mxu0 %v360
      %v485 = vpop.f32.mrb[0].mxu0
      %v486 = vadd.f32 0.0, %v485
      %v487 = vpop.f32.mrb[0].mxu0
      %v488 = vpop.f32.mrb[0].mxu0
      %v489 = vadd.f32 0.0, %v488
      %v490 = vpop.f32.mrb[0].mxu0
      %491 = vmatprep.mubr.bf16.mxu0 0
      %492 = vmatmul.mubr.bf16.gmra.mrb[0].mxu0 %v363
      %v493 = vpop.f32.mrb[0].mxu0
      %v494 = vadd.f32 0.0, %v493
      %v495 = vpop.f32.mrb[0].mxu0
      %v496 = vpop.f32.mrb[0].mxu0
      %v497 = vadd.f32 0.0, %v496
      %v498 = vpop.f32.mrb[0].mxu0
      %499 = vmatprep.mubr.bf16.mxu0 0
      %500 = vmatmul.mubr.bf16.gmra.mrb[0].mxu0 %v366
      %v501 = vpop.f32.mrb[0].mxu0
      %v502 = vadd.f32 0.0, %v501
      %v503 = vpop.f32.mrb[0].mxu0
      %v504 = vpop.f32.mrb[0].mxu0
      %v505 = vadd.f32 0.0, %v504
      %v506 = vpop.f32.mrb[0].mxu0
      %507 = vmatprep.mubr.bf16.mxu0 0
      %508 = vmatmul.mubr.bf16.gmra.mrb[0].mxu0 %v369
      %v509 = vpop.f32.mrb[0].mxu0
      %v510 = vadd.f32 0.0, %v509
      %v511 = vpop.f32.mrb[0].mxu0
      %v512 = vpop.f32.mrb[0].mxu0
      %v513 = vadd.f32 0.0, %v512
      %v514 = vpop.f32.mrb[0].mxu0
      %515 = vmatprep.mubr.bf16.mxu0 0
      %516 = vmatmul.mubr.bf16.gmra.mrb[0].mxu0 %v372
      %v517 = vpop.f32.mrb[0].mxu0
      %v518 = vadd.f32 0.0, %v517
      %v519 = vpop.f32.mrb[0].mxu0
      %v520 = vpop.f32.mrb[0].mxu0
      %v521 = vadd.f32 0.0, %v520
      %v522 = vpop.f32.mrb[0].mxu0
      %523 = vmatprep.mubr.bf16.mxu0 0
      %524 = vmatmul.mubr.bf16.gmra.mrb[0].mxu0 %v375
      %v525 = vpop.f32.mrb[0].mxu0
      %v526 = vadd.f32 0.0, %v525
      %v527 = vpop.f32.mrb[0].mxu0
      %v528 = vpop.f32.mrb[0].mxu0
      %v529 = vadd.f32 0.0, %v528
      %v530 = vpop.f32.mrb[0].mxu0
      %531 = vmatprep.mubr.bf16.mxu0 0
      %532 = vmatmul.mubr.bf16.gmra.mrb[0].mxu0 %v378
      %v533 = vpop.f32.mrb[0].mxu0
      %v534 = vadd.f32 0.0, %v533
      %v535 = vpop.f32.mrb[0].mxu0
      %v536 = vpop.f32.mrb[0].mxu0
      %v537 = vadd.f32 0.0, %v536
      %v538 = vpop.f32.mrb[0].mxu0
      %539 = vmatprep.mubr.bf16.mxu0 0
      %540 = vmatmul.mubr.bf16.gmra.mrb[0].mxu0 %v381
      %v541 = vpop.f32.mrb[0].mxu0
      %v542 = vadd.f32 0.0, %v541
      %v543 = vpop.f32.mrb[0].mxu0
      %v544 = vpop.f32.mrb[0].mxu0
      %v545 = vadd.f32 0.0, %v544
      %v546 = vpop.f32.mrb[0].mxu0
      %547 = vdwg.mxu0
      %v548 = vld [vmem:[%s2] sm:$0x1]
      %v550 = vlaneseq
      %v551 = vshrl.u32 %v550, 7
      %v552 = vsub.s32 0, %v551
      %v553 = vrot.slane %v548, %v552
      %v555 = vmul.f32 %v422, %v553
      %v556 = vmul.f32 %v425, %v553
      %v557 = vmul.f32 %v430, %v553
      %v558 = vmul.f32 %v433, %v553
      %v559 = vmul.f32 %v438, %v553
      %v560 = vmul.f32 %v441, %v553
      %v561 = vmul.f32 %v446, %v553
      %v562 = vmul.f32 %v449, %v553
      %v563 = vmul.f32 %v454, %v553
      %v564 = vmul.f32 %v457, %v553
      %v565 = vmul.f32 %v462, %v553
      %v566 = vmul.f32 %v465, %v553
      %v567 = vmul.f32 %v470, %v553
      %v568 = vmul.f32 %v473, %v553
      %v569 = vmul.f32 %v478, %v553
      %v570 = vmul.f32 %v481, %v553
      %v571 = vmul.f32 %v486, %v553
      %v572 = vmul.f32 %v489, %v553
      %v573 = vmul.f32 %v494, %v553
      %v574 = vmul.f32 %v497, %v553
      %v575 = vmul.f32 %v502, %v553
      %v576 = vmul.f32 %v505, %v553
      %v577 = vmul.f32 %v510, %v553
      %v578 = vmul.f32 %v513, %v553
      %v579 = vmul.f32 %v518, %v553
      %v580 = vmul.f32 %v521, %v553
      %v581 = vmul.f32 %v526, %v553
      %v582 = vmul.f32 %v529, %v553
      %v583 = vmul.f32 %v534, %v553
      %v584 = vmul.f32 %v537, %v553
      %v585 = vmul.f32 %v542, %v553
      %v586 = vmul.f32 %v545, %v553
      %v587 = vld [vmem:[%s3] sm:$0x1]
      %v589 = vlaneseq
      %v590 = vshrl.u32 %v589, 7
      %v591 = vsub.s32 0, %v590
      %v592 = vrot.slane %v587, %v591
      %v594 = vadd.f32 %v555, %v592
      %v595 = vadd.f32 %v556, %v592
      %v596 = vadd.f32 %v557, %v592
      %v597 = vadd.f32 %v558, %v592
      %v598 = vadd.f32 %v559, %v592
      %v599 = vadd.f32 %v560, %v592
      %v600 = vadd.f32 %v561, %v592
      %v601 = vadd.f32 %v562, %v592
      %v602 = vadd.f32 %v563, %v592
      %v603 = vadd.f32 %v564, %v592
      %v604 = vadd.f32 %v565, %v592
      %v605 = vadd.f32 %v566, %v592
      %v606 = vadd.f32 %v567, %v592
      %v607 = vadd.f32 %v568, %v592
      %v608 = vadd.f32 %v569, %v592
      %v609 = vadd.f32 %v570, %v592
      %v610 = vadd.f32 %v571, %v592
      %v611 = vadd.f32 %v572, %v592
      %v612 = vadd.f32 %v573, %v592
      %v613 = vadd.f32 %v574, %v592
      %v614 = vadd.f32 %v575, %v592
      %v615 = vadd.f32 %v576, %v592
      %v616 = vadd.f32 %v577, %v592
      %v617 = vadd.f32 %v578, %v592
      %v618 = vadd.f32 %v579, %v592
      %v619 = vadd.f32 %v580, %v592
      %v620 = vadd.f32 %v581, %v592
      %v621 = vadd.f32 %v582, %v592
      %v622 = vadd.f32 %v583, %v592
      %v623 = vadd.f32 %v584, %v592
      %v624 = vadd.f32 %v585, %v592
      %v625 = vadd.f32 %v586, %v592
      %v626 = vmax.f32 %v594, 0.0
      %v627 = vmax.f32 %v595, 0.0
      %v628 = vmax.f32 %v596, 0.0
      %v629 = vmax.f32 %v597, 0.0
      %v630 = vmax.f32 %v598, 0.0
      %v631 = vmax.f32 %v599, 0.0
      %v632 = vmax.f32 %v600, 0.0
      %v633 = vmax.f32 %v601, 0.0
      %v634 = vmax.f32 %v602, 0.0
      %v635 = vmax.f32 %v603, 0.0
      %v636 = vmax.f32 %v604, 0.0
      %v637 = vmax.f32 %v605, 0.0
      %v638 = vmax.f32 %v606, 0.0
      %v639 = vmax.f32 %v607, 0.0
      %v640 = vmax.f32 %v608, 0.0
      %v641 = vmax.f32 %v609, 0.0
      %v642 = vmax.f32 %v610, 0.0
      %v643 = vmax.f32 %v611, 0.0
      %v644 = vmax.f32 %v612, 0.0
      %v645 = vmax.f32 %v613, 0.0
      %v646 = vmax.f32 %v614, 0.0
      %v647 = vmax.f32 %v615, 0.0
      %v648 = vmax.f32 %v616, 0.0
      %v649 = vmax.f32 %v617, 0.0
      %v650 = vmax.f32 %v618, 0.0
      %v651 = vmax.f32 %v619, 0.0
      %v652 = vmax.f32 %v620, 0.0
      %v653 = vmax.f32 %v621, 0.0
      %v654 = vmax.f32 %v622, 0.0
      %v655 = vmax.f32 %v623, 0.0
      %v656 = vmax.f32 %v624, 0.0
      %v657 = vmax.f32 %v625, 0.0
      %658 = vst [vmem:[%s199] sm:$0xff] %v626
      %659 = vst [vmem:[%s199 + $0x8] sm:$0xff] %v627
      %660 = vst [vmem:[%s199 + $0x10] sm:$0xff] %v628
      %661 = vst [vmem:[%s199 + $0x18] sm:$0xff] %v629
      %662 = vst [vmem:[%s199 + $0x20] sm:$0xff] %v630
      %663 = vst [vmem:[%s199 + $0x28] sm:$0xff] %v631
      %664 = vst [vmem:[%s199 + $0x30] sm:$0xff] %v632
      %665 = vst [vmem:[%s199 + $0x38] sm:$0xff] %v633
      %666 = vst [vmem:[%s199 + $0x40] sm:$0xff] %v634
      %667 = vst [vmem:[%s199 + $0x48] sm:$0xff] %v635
      %668 = vst [vmem:[%s199 + $0x50] sm:$0xff] %v636
      %669 = vst [vmem:[%s199 + $0x58] sm:$0xff] %v637
      %670 = vst [vmem:[%s199 + $0x60] sm:$0xff] %v638
      %671 = vst [vmem:[%s199 + $0x68] sm:$0xff] %v639
      %672 = vst [vmem:[%s199 + $0x70] sm:$0xff] %v640
      %673 = vst [vmem:[%s199 + $0x78] sm:$0xff] %v641
      %674 = vst [vmem:[%s199 + $0x80] sm:$0xff] %v642
      %675 = vst [vmem:[%s199 + $0x88] sm:$0xff] %v643
      %676 = vst [vmem:[%s199 + $0x90] sm:$0xff] %v644
      %677 = vst [vmem:[%s199 + $0x98] sm:$0xff] %v645
      %678 = vst [vmem:[%s199 + $0xa0] sm:$0xff] %v646
      %679 = vst [vmem:[%s199 + $0xa8] sm:$0xff] %v647
      %680 = vst [vmem:[%s199 + $0xb0] sm:$0xff] %v648
      %681 = vst [vmem:[%s199 + $0xb8] sm:$0xff] %v649
      %682 = vst [vmem:[%s199 + $0xc0] sm:$0xff] %v650
      %683 = vst [vmem:[%s199 + $0xc8] sm:$0xff] %v651
      %684 = vst [vmem:[%s199 + $0xd0] sm:$0xff] %v652
      %685 = vst [vmem:[%s199 + $0xd8] sm:$0xff] %v653
      %686 = vst [vmem:[%s199 + $0xe0] sm:$0xff] %v654
      %687 = vst [vmem:[%s199 + $0xe8] sm:$0xff] %v655
      %688 = vst [vmem:[%s199 + $0xf0] sm:$0xff] %v656
      %689 = vst [vmem:[%s199 + $0xf8] sm:$0xff] %v657
      %s690 = smul.u32 32, %s15
      %p691 = scmp.lt.s32.totalorder %s690, 63
      %s692 = scalar_select %p691, %s690, 63
      %s693 = smul.addr %s692, 8
      %s694 = scalar_lea.vmem %s4, %s693
      // Predicated region
      $region37: #{conv_layer_forward.3} parent=35 // pred_check
        %p695 = pneg %p122
      $region38: #{conv_layer_forward.3} parent=35 // pred_check_branch
        %697 = sbr.rel (%p695) target = $region40
      $region39: #{conv_layer_forward.3} parent=35 // pred_region
        %s698 = smul.u32 32, %s15
      $region40: #{conv_layer_forward.3} parent=35 // pred_fallthru
        _
    $region36: #{conv_layer_forward.3} parent=5 // pred_fallthru
      _
    %p699 = scmp.le.s32.totalorder 2, %s10
    // Predicated region
    $region41: #{conv_layer_forward.3} parent=5 // pred_check
      %p700 = pneg %p699
    $region42: #{conv_layer_forward.3} parent=5 // pred_check_branch
      %702 = sbr.rel (%p700) target = $region44
    $region43: #{conv_layer_forward.3} parent=5 // pred_region
      %s703 = ssub.s32 %s10, 2
      // Predicated region
      $region45: #{conv_layer_forward.3} parent=43 // pred_check
        %p704 = pneg %p128
      $region46: #{conv_layer_forward.3} parent=43 // pred_check_branch
        %706 = sbr.rel (%p704) target = $region48
      $region47: #{conv_layer_forward.3} parent=43 // pred_region
        %s707 = smul.u32 32, %s16
        %p708 = scmp.lt.s32.totalorder %s707, 63
        %s709 = scalar_select %p708, %s707, 63
        %s710 = smul.addr %s709, 8
        %s711 = scalar_lea.vmem %s4, %s710
      $region48: #{conv_layer_forward.3} parent=43 // pred_fallthru
        _
    $region44: #{conv_layer_forward.3} parent=5 // pred_fallthru
      _
  $region6: #{conv_layer_forward.3} parent=0 // loop_footer
    %s14 = sadd.s32 1, %s10
  $region7: #{conv_layer_forward.3} parent=0 // loop_footer_branch
    %9 = sbr.rel target = $region3
  $region8: #{conv_layer_forward.3} parent=0 // loop_exit
    _

// kernel: conv_layer_forward.2
$region0: #{conv_layer_forward.2}
  #allocation0 [shape = 'u32[]', space=smem, size = 0x4, offset = 0x4, fixed_abs, tag = 'smem constant byte address 0x4 - core index']
  #allocation1 [shape = 'u32[144,128]{1,0:T(1,128)}', space=vmem, size = 0x12000, scoped, tag = 'internal scratch']
  #allocation2 [shape = 'f32[8,128]{1,0:T(8,128)}', space=vmem, size = 0x1000, scoped, tag = 'scratch operand']
  %s0 = inlined_call_operand.vmem [shape: bf16[512,36], index: 0, kind: input, shape index: {}]
  %s1 = inlined_call_operand.vmem [shape: bf16[36,128], index: 1, kind: input, shape index: {}]
  %s2 = inlined_call_operand.vmem [shape: f32[2,8,128], index: 2, kind: output, shape index: {}]
  %s3 = sld [smem:[#allocation0]]
  $region49: #{conv_layer_forward.2} parent=0
    _
  %s5 = ssub.s32 1, %s3
  %s6 = scalar_select 0, %s5, %s3
  loop: start=0, step=1, limit=4
  $region2: #{conv_layer_forward.2} parent=0 // loop_pre_header
    _
  $region3: #{conv_layer_forward.2} parent=0 // loop_header
    %s8 = sphi 0, %s12
    %p9 = scmp.ge.s32.totalorder %s8, 4
    %s15 = sphi 0, %s27
    %s16 = sphi 0, %s23
    %s17 = sphi 0, %s15
    %s18 = sphi 0, %s16
    %s19 = sphi 0, %s17
    %s20 = sphi 0, %s18
    %s32 = sphi 0, %s34
    %s35 = sphi 0, %s32
    %s36 = sphi 0, %s35
    %s52 = sphi 0, %s36
    %s56 = sphi 0, %s56
    %s58 = sphi 0, %s56
    %s59 = sphi 0, %s58
    %s73 = sphi 0, %s59
    %s79 = sphi 0, %s81
    %s82 = sphi 0, %s79
    %s83 = sphi 0, %s82
    %s99 = sphi 0, %s83
  $region4: #{conv_layer_forward.2} parent=0 // loop_header_branch
    %11 = sbr.rel (%p9) target = $region8
  $region5: #{conv_layer_forward.2} parent=0 // loop_body
    %s13 = ssub.s32 %s8, 1
    %s14 = ssub.s32 %s8, 2
    %s21 = sadd.s32 1, %s16
    %p22 = scmp.ge.s32.totalorder %s21, 1
    %s23 = scalar_select %p22, 0, %s21
    %s24 = sadd.s32 1, %s15
    %s25 = scalar_select %p22, %s24, %s15
    %p26 = scmp.ge.s32.totalorder %s25, 2
    %s27 = scalar_select %p26, 0, %s25
    %s28 = sadd.s32 %s15, %s16
    %s29 = sadd.s32 %s27, %s23
    %s30 = ssub.s32 %s28, %s29
    %p31 = scmp.eq.s32.totalorder %s30, 0
    %s33 = sadd.s32 %s32, 1
    %s34 = scalar_select %p31, %s32, %s33
    %p37 = pneg %p31
    %p38 = scmp.eq.s32.totalorder %s8, 1
    %p39 = por %p37, %p38
    %p40 = scmp.ne.s32.totalorder %s32, %s35
    %p41 = scmp.eq.s32.totalorder %s8, 0
    %p42 = por %p40, %p41
    %p43 = scmp.ne.s32.totalorder %s32, %s35
    %p44 = scmp.eq.s32.totalorder %s13, 1
    %p45 = por %p43, %p44
    %p46 = scmp.ne.s32.totalorder %s35, %s36
    %p47 = scmp.eq.s32.totalorder %s13, 0
    %p48 = por %p46, %p47
    %p49 = scmp.ne.s32.totalorder %s35, %s36
    %p50 = scmp.eq.s32.totalorder %s14, 1
    %p51 = por %p49, %p50
    %p53 = scmp.ne.s32.totalorder %s36, %s52
    %p54 = scmp.eq.s32.totalorder %s14, 0
    %p55 = por %p53, %p54
    %s57 = sadd.s32 %s56, 1
    %p60 = scmp.eq.s32.totalorder %s8, 1
    %p61 = scmp.ne.s32.totalorder %s56, %s58
    %p62 = scmp.eq.s32.totalorder %s8, 0
    %p63 = por %p61, %p62
    %p64 = scmp.ne.s32.totalorder %s56, %s58
    %p65 = scmp.eq.s32.totalorder %s13, 1
    %p66 = por %p64, %p65
    %p67 = scmp.ne.s32.totalorder %s58, %s59
    %p68 = scmp.eq.s32.totalorder %s13, 0
    %p69 = por %p67, %p68
    %p70 = scmp.ne.s32.totalorder %s58, %s59
    %p71 = scmp.eq.s32.totalorder %s14, 1
    %p72 = por %p70, %p71
    %p74 = scmp.ne.s32.totalorder %s59, %s73
    %p75 = scmp.eq.s32.totalorder %s14, 0
    %p76 = por %p74, %p75
    %s77 = ssub.s32 %s15, %s27
    %p78 = scmp.eq.s32.totalorder %s77, 0
    %s80 = sadd.s32 %s79, 1
    %s81 = scalar_select %p78, %s79, %s80
    %p84 = pneg %p78
    %p85 = scmp.eq.s32.totalorder %s8, 1
    %p86 = por %p84, %p85
    %p87 = scmp.ne.s32.totalorder %s79, %s82
    %p88 = scmp.eq.s32.totalorder %s8, 0
    %p89 = por %p87, %p88
    %p90 = scmp.ne.s32.totalorder %s79, %s82
    %p91 = scmp.eq.s32.totalorder %s13, 1
    %p92 = por %p90, %p91
    %p93 = scmp.ne.s32.totalorder %s82, %s83
    %p94 = scmp.eq.s32.totalorder %s13, 0
    %p95 = por %p93, %p94
    %p96 = scmp.ne.s32.totalorder %s82, %s83
    %p97 = scmp.eq.s32.totalorder %s14, 1
    %p98 = por %p96, %p97
    %p100 = scmp.ne.s32.totalorder %s83, %s99
    %p101 = scmp.eq.s32.totalorder %s14, 0
    %p102 = por %p100, %p101
    %p103 = scmp.le.s32.totalorder 1, %s8
    %p104 = scmp.lt.s32.totalorder %s8, 3
    %p105 = pnand %p103, %p104
    %p106 = pneg %p105
    // Predicated region
    $region9: #{conv_layer_forward.2} parent=5 // pred_check
      _
    $region10: #{conv_layer_forward.2} parent=5 // pred_check_branch
      %108 = sbr.rel (%p105) target = $region12
    $region11: #{conv_layer_forward.2} parent=5 // pred_region
      %s109 = ssub.s32 %s8, 1
      // Predicated region
      $region13: #{conv_layer_forward.2} parent=11 // pred_check
        %p110 = pneg %p69
      $region14: #{conv_layer_forward.2} parent=11 // pred_check_branch
        %112 = sbr.rel (%p110) target = $region16
      $region15: #{conv_layer_forward.2} parent=11 // pred_region
        _
      $region16: #{conv_layer_forward.2} parent=11 // pred_fallthru
        _
    $region12: #{conv_layer_forward.2} parent=5 // pred_fallthru
      _
    %p113 = scmp.lt.s32.totalorder %s8, 2
    // Predicated region
    $region17: #{conv_layer_forward.2} parent=5 // pred_check
      %p114 = pneg %p113
    $region18: #{conv_layer_forward.2} parent=5 // pred_check_branch
      %116 = sbr.rel (%p114) target = $region20
    $region19: #{conv_layer_forward.2} parent=5 // pred_region
      // Predicated region
      $region21: #{conv_layer_forward.2} parent=19 // pred_check
        %p117 = pneg %p42
      $region22: #{conv_layer_forward.2} parent=19 // pred_check_branch
        %119 = sbr.rel (%p117) target = $region24
      $region23: #{conv_layer_forward.2} parent=19 // pred_region
        %s120 = sadd.s32 %s15, %s16
        %s121 = smul.u32 32, %s120
        %p122 = scmp.lt.s32.totalorder %s121, 63
        %s123 = scalar_select %p122, %s121, 63
        %s124 = smul.addr %s123, 4
        %s125 = scalar_lea.vmem %s0, %s124
        %s126 = sadd.s32 %s15, %s16
        %s127 = smul.u32 32, %s126
      $region24: #{conv_layer_forward.2} parent=19 // pred_fallthru
        _
    $region20: #{conv_layer_forward.2} parent=5 // pred_fallthru
      _
    %p128 = scmp.le.s32.totalorder 1, %s8
    %p129 = scmp.lt.s32.totalorder %s8, 3
    %p130 = pnand %p128, %p129
    %p131 = pneg %p130
    // Predicated region
    $region25: #{conv_layer_forward.2} parent=5 // pred_check
      _
    $region26: #{conv_layer_forward.2} parent=5 // pred_check_branch
      %133 = sbr.rel (%p130) target = $region28
    $region27: #{conv_layer_forward.2} parent=5 // pred_region
      %s134 = ssub.s32 %s8, 1
      %s135 = sadd.s32 %s17, %s18
      %s136 = smul.u32 32, %s135
      %p137 = scmp.lt.s32.totalorder %s136, 63
      %s138 = scalar_select %p137, %s136, 63
      %s139 = smul.addr %s138, 4
      %s140 = scalar_lea.vmem %s0, %s139
      %p141 = pneg %p48
      %p142 = pneg %p45
      %p143 = pneg %p69
      %p144 = pneg %p66
      %p145 = pneg %p95
      %p146 = pneg %p92
      %p147 = scmp.lt.s32.totalorder %s17, 1
      %s148 = scalar_select %p147, %s17, 1
      %s149 = smul.addr %s148, 8
      %s150 = scalar_lea.vmem %s2, %s149
      %s151 = sadd.s32 %s17, %s18
      %s152 = smul.u32 32, %s151
      %p153 = scmp.lt.s32.totalorder %s152, 63
      %s154 = scalar_select %p153, %s152, 63
      %s155 = smul.addr %s154, 4
      %s156 = scalar_lea.vmem %s0, %s155
      %s157 = sadd.s32 %s17, %s18
      %s158 = smul.u32 32, %s157
      %p159 = scmp.lt.s32.totalorder %s17, 1
      %s160 = scalar_select %p159, %s17, 1
      %s161 = smul.addr %s160, 8
      %s162 = scalar_lea.vmem %s2, %s161
      %p164 = scmp.eq.s32.totalorder %s18, 0
      // Predicated region
      $region29: #{conv_layer_forward.2} parent=27 // pred_check
        %p165 = pneg %p164
      $region30: #{conv_layer_forward.2} parent=27 // pred_check_branch
        %167 = sbr.rel (%p165) target = $region32
      $region31: #{conv_layer_forward.2} parent=27 // pred_region
        %168 = vst [vmem:[#allocation2] sm:$0xff] 0.0
      $region32: #{conv_layer_forward.2} parent=27 // pred_fallthru
        _
      %v169 = vld [vmem:[%s156] sm:$0xf]
      %v170 = vld [vmem:[%s156 + $0x4] sm:$0xf]
      %v171 = vld [vmem:[%s156 + $0x8] sm:$0xf]
      %v172 = vld [vmem:[%s156 + $0xc] sm:$0xf]
      %v173 = vld [vmem:[%s156 + $0x10] sm:$0xf]
      %v174 = vld [vmem:[%s156 + $0x14] sm:$0xf]
      %v175 = vld [vmem:[%s156 + $0x18] sm:$0xf]
      %v176 = vld [vmem:[%s156 + $0x1c] sm:$0xf]
      %v177 = vld [vmem:[%s156 + $0x20] sm:$0xf]
      %v178 = vld [vmem:[%s156 + $0x24] sm:$0xf]
      %v179 = vld [vmem:[%s156 + $0x28] sm:$0xf]
      %v180 = vld [vmem:[%s156 + $0x2c] sm:$0xf]
      %v181 = vld [vmem:[%s156 + $0x30] sm:$0xf]
      %v182 = vld [vmem:[%s156 + $0x34] sm:$0xf]
      %v183 = vld [vmem:[%s156 + $0x38] sm:$0xf]
      %v184 = vld [vmem:[%s156 + $0x3c] sm:$0xf]
      %v185 = vld [vmem:[%s156 + $0x40] sm:$0xf]
      %v186 = vld [vmem:[%s156 + $0x44] sm:$0xf]
      %v187 = vld [vmem:[%s156 + $0x48] sm:$0xf]
      %v188 = vld [vmem:[%s156 + $0x4c] sm:$0xf]
      %v189 = vld [vmem:[%s156 + $0x50] sm:$0xf]
      %v190 = vld [vmem:[%s156 + $0x54] sm:$0xf]
      %v191 = vld [vmem:[%s156 + $0x58] sm:$0xf]
      %v192 = vld [vmem:[%s156 + $0x5c] sm:$0xf]
      %v193 = vld [vmem:[%s156 + $0x60] sm:$0xf]
      %v194 = vld [vmem:[%s156 + $0x64] sm:$0xf]
      %v195 = vld [vmem:[%s156 + $0x68] sm:$0xf]
      %v196 = vld [vmem:[%s156 + $0x6c] sm:$0xf]
      %v197 = vld [vmem:[%s156 + $0x70] sm:$0xf]
      %v198 = vld [vmem:[%s156 + $0x74] sm:$0xf]
      %v199 = vld [vmem:[%s156 + $0x78] sm:$0xf]
      %v200 = vld [vmem:[%s156 + $0x7c] sm:$0xf]
      %v201 = vld [vmem:[%s1] sm:$0xf]
      %v202 = vld [vmem:[%s1 + $0x4] sm:$0xf]
      %v203 = vld [vmem:[%s1 + $0x8] sm:$0xf]
      %v204 = vld [vmem:[%s1 + $0xc] sm:$0xf]
      %v205 = vld [vmem:[%s1 + $0x10] sm:$0x3]
      %v238 = vunpack.c.l.b16 %v169
      %v239 = vunpack.c.l.b16 %v170
      %v240 = vunpack.c.l.b16 %v171
      %v241 = vunpack.c.l.b16 %v172
      %v242 = vunpack.c.l.b16 %v173
      %v243 = vunpack.c.l.b16 %v174
      %v244 = vunpack.c.l.b16 %v175
      %v245 = vunpack.c.l.b16 %v176
      %v246 = vunpack.c.l.b16 %v177
      %v247 = vunpack.c.l.b16 %v178
      %v248 = vunpack.c.l.b16 %v179
      %v249 = vunpack.c.l.b16 %v180
      %v250 = vunpack.c.l.b16 %v181
      %v251 = vunpack.c.l.b16 %v182
      %v252 = vunpack.c.l.b16 %v183
      %v253 = vunpack.c.l.b16 %v184
      %v254 = vunpack.c.l.b16 %v185
      %v255 = vunpack.c.l.b16 %v186
      %v256 = vunpack.c.l.b16 %v187
      %v257 = vunpack.c.l.b16 %v188
      %v258 = vunpack.c.l.b16 %v189
      %v259 = vunpack.c.l.b16 %v190
      %v260 = vunpack.c.l.b16 %v191
      %v261 = vunpack.c.l.b16 %v192
      %v262 = vunpack.c.l.b16 %v193
      %v263 = vunpack.c.l.b16 %v194
      %v264 = vunpack.c.l.b16 %v195
      %v265 = vunpack.c.l.b16 %v196
      %v266 = vunpack.c.l.b16 %v197
      %v267 = vunpack.c.l.b16 %v198
      %v268 = vunpack.c.l.b16 %v199
      %v269 = vunpack.c.l.b16 %v200
      %v270 = vpack.c.b16 %v239, %v238
      %v271 = vpack.c.b16 %v241, %v240
      %v272 = vpack.c.b16 %v243, %v242
      %v273 = vpack.c.b16 %v245, %v244
      %v274 = vpack.c.b16 %v247, %v246
      %v275 = vpack.c.b16 %v249, %v248
      %v276 = vpack.c.b16 %v251, %v250
      %v277 = vpack.c.b16 %v253, %v252
      %v278 = vpack.c.b16 %v255, %v254
      %v279 = vpack.c.b16 %v257, %v256
      %v280 = vpack.c.b16 %v259, %v258
      %v281 = vpack.c.b16 %v261, %v260
      %v282 = vpack.c.b16 %v263, %v262
      %v283 = vpack.c.b16 %v265, %v264
      %v284 = vpack.c.b16 %v267, %v266
      %v285 = vpack.c.b16 %v269, %v268
      %v291 = vunpack.c.l.b16 %v201
      %v292 = vunpack.c.l.b16 %v202
      %v293 = vunpack.c.l.b16 %v203
      %v294 = vunpack.c.l.b16 %v204
      %v295 = vunpack.c.l.b16 %v205
      %v296 = vpack.c.b16 %v292, %v291
      %v297 = vpack.c.b16 %v294, %v293
      %v298 = vpack.c.b16 %v295, %v295
      %vm301 = vcmask 293888
      %v303 = vsel %vm301, %v270, 0
      %v306 = vsel %vm301, %v271, 0
      %v309 = vsel %vm301, %v272, 0
      %v312 = vsel %vm301, %v273, 0
      %v315 = vsel %vm301, %v274, 0
      %v318 = vsel %vm301, %v275, 0
      %v321 = vsel %vm301, %v276, 0
      %v324 = vsel %vm301, %v277, 0
      %v327 = vsel %vm301, %v278, 0
      %v330 = vsel %vm301, %v279, 0
      %v333 = vsel %vm301, %v280, 0
      %v336 = vsel %vm301, %v281, 0
      %v339 = vsel %vm301, %v282, 0
      %v342 = vsel %vm301, %v283, 0
      %v345 = vsel %vm301, %v284, 0
      %v348 = vsel %vm301, %v285, 0
      %vm350 = vcmask 1041408
      %v352 = vsel %vm350, %v298, 0
      %354 = vmatprep.subr.bf16.mxu0 0
      %355 = vmatpush1.bf16.msra.mxu0 %v296
      %356 = vmatprep.subr.bf16.mxu0 0
      %357 = vmatpush1.bf16.msra.mxu0 %v297
      %358 = vmatprep.subr.bf16.mxu0 0
      %359 = vmatpush1.bf16.msra.mxu0 %v352
      %360 = vmatprep.subr.bf16.mxu0 0
      %361 = vmatpush1.bf16.msra.mxu0 0
      %362 = vmatprep.subr.bf16.mxu0 0
      %363 = vmatpush1.bf16.msra.mxu0 0
      %364 = vmatprep.subr.bf16.mxu0 0
      %365 = vmatpush1.bf16.msra.mxu0 0
      %366 = vmatprep.subr.bf16.mxu0 0
      %367 = vmatpush1.bf16.msra.mxu0 0
      %368 = vmatprep.subr.bf16.mxu0 0
      %369 = vmatpush1.bf16.msra.mxu0 0
      %370 = vmatprep.subr.bf16.mxu0 0
      %371 = vmatpush1.bf16.msra.mxu0 0
      %372 = vmatprep.subr.bf16.mxu0 0
      %373 = vmatpush1.bf16.msra.mxu0 0
      %374 = vmatprep.subr.bf16.mxu0 0
      %375 = vmatpush1.bf16.msra.mxu0 0
      %376 = vmatprep.subr.bf16.mxu0 0
      %377 = vmatpush1.bf16.msra.mxu0 0
      %378 = vmatprep.subr.bf16.mxu0 0
      %379 = vmatpush1.bf16.msra.mxu0 0
      %380 = vmatprep.subr.bf16.mxu0 0
      %381 = vmatpush1.bf16.msra.mxu0 0
      %382 = vmatprep.subr.bf16.mxu0 0
      %383 = vmatpush1.bf16.msra.mxu0 0
      %384 = vmatprep.subr.bf16.mxu0 0
      %385 = vmatpush1.bf16.msra.mxu0 0
      %386 = vmatprep.mubr.bf16.mxu0 0
      %387 = vmatmul.mubr.bf16.gmra.mrb[0].mxu0 %v303
      %v388 = vpop.f32.mrb[0].mxu0
      %v389 = vadd.f32 0.0, %v388
      %v390 = vpop.f32.mrb[0].mxu0
      %v391 = vpop.f32.mrb[0].mxu0
      %v392 = vadd.f32 0.0, %v391
      %v393 = vpop.f32.mrb[0].mxu0
      %394 = vmatprep.mubr.bf16.mxu0 0
      %395 = vmatmul.mubr.bf16.gmra.mrb[0].mxu0 %v306
      %v396 = vpop.f32.mrb[0].mxu0
      %v397 = vadd.f32 0.0, %v396
      %v398 = vpop.f32.mrb[0].mxu0
      %v399 = vpop.f32.mrb[0].mxu0
      %v400 = vadd.f32 0.0, %v399
      %v401 = vpop.f32.mrb[0].mxu0
      %402 = vmatprep.mubr.bf16.mxu0 0
      %403 = vmatmul.mubr.bf16.gmra.mrb[0].mxu0 %v309
      %v404 = vpop.f32.mrb[0].mxu0
      %v405 = vadd.f32 0.0, %v404
      %v406 = vpop.f32.mrb[0].mxu0
      %v407 = vpop.f32.mrb[0].mxu0
      %v408 = vadd.f32 0.0, %v407
      %v409 = vpop.f32.mrb[0].mxu0
      %410 = vmatprep.mubr.bf16.mxu0 0
      %411 = vmatmul.mubr.bf16.gmra.mrb[0].mxu0 %v312
      %v412 = vpop.f32.mrb[0].mxu0
      %v413 = vadd.f32 0.0, %v412
      %v414 = vpop.f32.mrb[0].mxu0
      %v415 = vpop.f32.mrb[0].mxu0
      %v416 = vadd.f32 0.0, %v415
      %v417 = vpop.f32.mrb[0].mxu0
      %418 = vmatprep.mubr.bf16.mxu0 0
      %419 = vmatmul.mubr.bf16.gmra.mrb[0].mxu0 %v315
      %v420 = vpop.f32.mrb[0].mxu0
      %v421 = vadd.f32 0.0, %v420
      %v422 = vpop.f32.mrb[0].mxu0
      %v423 = vpop.f32.mrb[0].mxu0
      %v424 = vadd.f32 0.0, %v423
      %v425 = vpop.f32.mrb[0].mxu0
      %426 = vmatprep.mubr.bf16.mxu0 0
      %427 = vmatmul.mubr.bf16.gmra.mrb[0].mxu0 %v318
      %v428 = vpop.f32.mrb[0].mxu0
      %v429 = vadd.f32 0.0, %v428
      %v430 = vpop.f32.mrb[0].mxu0
      %v431 = vpop.f32.mrb[0].mxu0
      %v432 = vadd.f32 0.0, %v431
      %v433 = vpop.f32.mrb[0].mxu0
      %434 = vmatprep.mubr.bf16.mxu0 0
      %435 = vmatmul.mubr.bf16.gmra.mrb[0].mxu0 %v321
      %v436 = vpop.f32.mrb[0].mxu0
      %v437 = vadd.f32 0.0, %v436
      %v438 = vpop.f32.mrb[0].mxu0
      %v439 = vpop.f32.mrb[0].mxu0
      %v440 = vadd.f32 0.0, %v439
      %v441 = vpop.f32.mrb[0].mxu0
      %442 = vmatprep.mubr.bf16.mxu0 0
      %443 = vmatmul.mubr.bf16.gmra.mrb[0].mxu0 %v324
      %v444 = vpop.f32.mrb[0].mxu0
      %v445 = vadd.f32 0.0, %v444
      %v446 = vpop.f32.mrb[0].mxu0
      %v447 = vpop.f32.mrb[0].mxu0
      %v448 = vadd.f32 0.0, %v447
      %v449 = vpop.f32.mrb[0].mxu0
      %450 = vmatprep.mubr.bf16.mxu0 0
      %451 = vmatmul.mubr.bf16.gmra.mrb[0].mxu0 %v327
      %v452 = vpop.f32.mrb[0].mxu0
      %v453 = vadd.f32 0.0, %v452
      %v454 = vpop.f32.mrb[0].mxu0
      %v455 = vpop.f32.mrb[0].mxu0
      %v456 = vadd.f32 0.0, %v455
      %v457 = vpop.f32.mrb[0].mxu0
      %458 = vmatprep.mubr.bf16.mxu0 0
      %459 = vmatmul.mubr.bf16.gmra.mrb[0].mxu0 %v330
      %v460 = vpop.f32.mrb[0].mxu0
      %v461 = vadd.f32 0.0, %v460
      %v462 = vpop.f32.mrb[0].mxu0
      %v463 = vpop.f32.mrb[0].mxu0
      %v464 = vadd.f32 0.0, %v463
      %v465 = vpop.f32.mrb[0].mxu0
      %466 = vmatprep.mubr.bf16.mxu0 0
      %467 = vmatmul.mubr.bf16.gmra.mrb[0].mxu0 %v333
      %v468 = vpop.f32.mrb[0].mxu0
      %v469 = vadd.f32 0.0, %v468
      %v470 = vpop.f32.mrb[0].mxu0
      %v471 = vpop.f32.mrb[0].mxu0
      %v472 = vadd.f32 0.0, %v471
      %v473 = vpop.f32.mrb[0].mxu0
      %474 = vmatprep.mubr.bf16.mxu0 0
      %475 = vmatmul.mubr.bf16.gmra.mrb[0].mxu0 %v336
      %v476 = vpop.f32.mrb[0].mxu0
      %v477 = vadd.f32 0.0, %v476
      %v478 = vpop.f32.mrb[0].mxu0
      %v479 = vpop.f32.mrb[0].mxu0
      %v480 = vadd.f32 0.0, %v479
      %v481 = vpop.f32.mrb[0].mxu0
      %482 = vmatprep.mubr.bf16.mxu0 0
      %483 = vmatmul.mubr.bf16.gmra.mrb[0].mxu0 %v339
      %v484 = vpop.f32.mrb[0].mxu0
      %v485 = vadd.f32 0.0, %v484
      %v486 = vpop.f32.mrb[0].mxu0
      %v487 = vpop.f32.mrb[0].mxu0
      %v488 = vadd.f32 0.0, %v487
      %v489 = vpop.f32.mrb[0].mxu0
      %490 = vmatprep.mubr.bf16.mxu0 0
      %491 = vmatmul.mubr.bf16.gmra.mrb[0].mxu0 %v342
      %v492 = vpop.f32.mrb[0].mxu0
      %v493 = vadd.f32 0.0, %v492
      %v494 = vpop.f32.mrb[0].mxu0
      %v495 = vpop.f32.mrb[0].mxu0
      %v496 = vadd.f32 0.0, %v495
      %v497 = vpop.f32.mrb[0].mxu0
      %498 = vmatprep.mubr.bf16.mxu0 0
      %499 = vmatmul.mubr.bf16.gmra.mrb[0].mxu0 %v345
      %v500 = vpop.f32.mrb[0].mxu0
      %v501 = vadd.f32 0.0, %v500
      %v502 = vpop.f32.mrb[0].mxu0
      %v503 = vpop.f32.mrb[0].mxu0
      %v504 = vadd.f32 0.0, %v503
      %v505 = vpop.f32.mrb[0].mxu0
      %506 = vmatprep.mubr.bf16.mxu0 0
      %507 = vmatmul.mubr.bf16.gmra.mrb[0].mxu0 %v348
      %v508 = vpop.f32.mrb[0].mxu0
      %v509 = vadd.f32 0.0, %v508
      %v510 = vpop.f32.mrb[0].mxu0
      %v511 = vpop.f32.mrb[0].mxu0
      %v512 = vadd.f32 0.0, %v511
      %v513 = vpop.f32.mrb[0].mxu0
      %514 = vdwg.mxu0
      %v515 = vld [vmem:[#allocation2] sm:$0x1]
      %v516 = vadd.f32 %v389, %v392
      %v517 = vadd.f32 %v516, %v397
      %v518 = vadd.f32 %v517, %v400
      %v519 = vadd.f32 %v518, %v405
      %v520 = vadd.f32 %v519, %v408
      %v521 = vadd.f32 %v520, %v413
      %v522 = vadd.f32 %v521, %v416
      %v523 = vadd.f32 %v522, %v421
      %v524 = vadd.f32 %v523, %v424
      %v525 = vadd.f32 %v524, %v429
      %v526 = vadd.f32 %v525, %v432
      %v527 = vadd.f32 %v526, %v437
      %v528 = vadd.f32 %v527, %v440
      %v529 = vadd.f32 %v528, %v445
      %v530 = vadd.f32 %v529, %v448
      %v531 = vadd.f32 %v530, %v453
      %v532 = vadd.f32 %v531, %v456
      %v533 = vadd.f32 %v532, %v461
      %v534 = vadd.f32 %v533, %v464
      %v535 = vadd.f32 %v534, %v469
      %v536 = vadd.f32 %v535, %v472
      %v537 = vadd.f32 %v536, %v477
      %v538 = vadd.f32 %v537, %v480
      %v539 = vadd.f32 %v538, %v485
      %v540 = vadd.f32 %v539, %v488
      %v541 = vadd.f32 %v540, %v493
      %v542 = vadd.f32 %v541, %v496
      %v543 = vadd.f32 %v542, %v501
      %v544 = vadd.f32 %v543, %v504
      %v545 = vadd.f32 %v544, %v509
      %v546 = vadd.f32 %v545, %v512
      %v547 = vrot.slane %v546, 4
      %v548 = vadd.f32 %v546, %v547
      %v549 = vrot.slane %v548, 2
      %v550 = vadd.f32 %v548, %v549
      %v551 = vrot.slane %v550, 1
      %v552 = vadd.f32 %v550, %v551
      %v553 = vadd.f32 %v515, %v552
      %554 = vst [vmem:[#allocation2] sm:$0x1] %v553
      %v555 = vld [vmem:[#allocation2 + $0x1] sm:$0x1]
      %v556 = vmul.f32 %v389, %v389
      %v557 = vmul.f32 %v392, %v392
      %v558 = vmul.f32 %v397, %v397
      %v559 = vmul.f32 %v400, %v400
      %v560 = vmul.f32 %v405, %v405
      %v561 = vmul.f32 %v408, %v408
      %v562 = vmul.f32 %v413, %v413
      %v563 = vmul.f32 %v416, %v416
      %v564 = vmul.f32 %v421, %v421
      %v565 = vmul.f32 %v424, %v424
      %v566 = vmul.f32 %v429, %v429
      %v567 = vmul.f32 %v432, %v432
      %v568 = vmul.f32 %v437, %v437
      %v569 = vmul.f32 %v440, %v440
      %v570 = vmul.f32 %v445, %v445
      %v571 = vmul.f32 %v448, %v448
      %v572 = vmul.f32 %v453, %v453
      %v573 = vmul.f32 %v456, %v456
      %v574 = vmul.f32 %v461, %v461
      %v575 = vmul.f32 %v464, %v464
      %v576 = vmul.f32 %v469, %v469
      %v577 = vmul.f32 %v472, %v472
      %v578 = vmul.f32 %v477, %v477
      %v579 = vmul.f32 %v480, %v480
      %v580 = vmul.f32 %v485, %v485
      %v581 = vmul.f32 %v488, %v488
      %v582 = vmul.f32 %v493, %v493
      %v583 = vmul.f32 %v496, %v496
      %v584 = vmul.f32 %v501, %v501
      %v585 = vmul.f32 %v504, %v504
      %v586 = vmul.f32 %v509, %v509
      %v587 = vmul.f32 %v512, %v512
      %v588 = vadd.f32 %v556, %v557
      %v589 = vadd.f32 %v588, %v558
      %v590 = vadd.f32 %v589, %v559
      %v591 = vadd.f32 %v590, %v560
      %v592 = vadd.f32 %v591, %v561
      %v593 = vadd.f32 %v592, %v562
      %v594 = vadd.f32 %v593, %v563
      %v595 = vadd.f32 %v594, %v564
      %v596 = vadd.f32 %v595, %v565
      %v597 = vadd.f32 %v596, %v566
      %v598 = vadd.f32 %v597, %v567
      %v599 = vadd.f32 %v598, %v568
      %v600 = vadd.f32 %v599, %v569
      %v601 = vadd.f32 %v600, %v570
      %v602 = vadd.f32 %v601, %v571
      %v603 = vadd.f32 %v602, %v572
      %v604 = vadd.f32 %v603, %v573
      %v605 = vadd.f32 %v604, %v574
      %v606 = vadd.f32 %v605, %v575
      %v607 = vadd.f32 %v606, %v576
      %v608 = vadd.f32 %v607, %v577
      %v609 = vadd.f32 %v608, %v578
      %v610 = vadd.f32 %v609, %v579
      %v611 = vadd.f32 %v610, %v580
      %v612 = vadd.f32 %v611, %v581
      %v613 = vadd.f32 %v612, %v582
      %v614 = vadd.f32 %v613, %v583
      %v615 = vadd.f32 %v614, %v584
      %v616 = vadd.f32 %v615, %v585
      %v617 = vadd.f32 %v616, %v586
      %v618 = vadd.f32 %v617, %v587
      %v619 = vrot.slane %v618, 4
      %v620 = vadd.f32 %v618, %v619
      %v621 = vrot.slane %v620, 2
      %v622 = vadd.f32 %v620, %v621
      %v623 = vrot.slane %v622, 1
      %v624 = vadd.f32 %v622, %v623
      %v625 = vadd.f32 %v555, %v624
      %626 = vst [vmem:[#allocation2 + $0x1] sm:$0x1] %v625
      // Predicated region
      $region33: #{conv_layer_forward.2} parent=27 // pred_check
        %p627 = pneg %p164
      $region34: #{conv_layer_forward.2} parent=27 // pred_check_branch
        %629 = sbr.rel (%p627) target = $region36
      $region35: #{conv_layer_forward.2} parent=27 // pred_region
        %v630 = vld [vmem:[#allocation2] sm:$0xff]
        %631 = vst [vmem:[%s162] sm:$0xff] %v630
      $region36: #{conv_layer_forward.2} parent=27 // pred_fallthru
        _
      %p632 = scmp.lt.s32.totalorder %s17, 1
      %s633 = scalar_select %p632, %s17, 1
      %s634 = smul.addr %s633, 8
      %s635 = scalar_lea.vmem %s2, %s634
      // Predicated region
      $region37: #{conv_layer_forward.2} parent=27 // pred_check
        %p636 = pneg %p92
      $region38: #{conv_layer_forward.2} parent=27 // pred_check_branch
        %638 = sbr.rel (%p636) target = $region40
      $region39: #{conv_layer_forward.2} parent=27 // pred_region
        _
      $region40: #{conv_layer_forward.2} parent=27 // pred_fallthru
        _
    $region28: #{conv_layer_forward.2} parent=5 // pred_fallthru
      _
    %p639 = scmp.le.s32.totalorder 2, %s8
    // Predicated region
    $region41: #{conv_layer_forward.2} parent=5 // pred_check
      %p640 = pneg %p639
    $region42: #{conv_layer_forward.2} parent=5 // pred_check_branch
      %642 = sbr.rel (%p640) target = $region44
    $region43: #{conv_layer_forward.2} parent=5 // pred_region
      %s643 = ssub.s32 %s8, 2
      // Predicated region
      $region45: #{conv_layer_forward.2} parent=43 // pred_check
        %p644 = pneg %p98
      $region46: #{conv_layer_forward.2} parent=43 // pred_check_branch
        %646 = sbr.rel (%p644) target = $region48
      $region47: #{conv_layer_forward.2} parent=43 // pred_region
        %p647 = scmp.lt.s32.totalorder %s19, 1
        %s648 = scalar_select %p647, %s19, 1
        %s649 = smul.addr %s648, 8
        %s650 = scalar_lea.vmem %s2, %s649
      $region48: #{conv_layer_forward.2} parent=43 // pred_fallthru
        _
    $region44: #{conv_layer_forward.2} parent=5 // pred_fallthru
      _
  $region6: #{conv_layer_forward.2} parent=0 // loop_footer
    %s12 = sadd.s32 1, %s8
  $region7: #{conv_layer_forward.2} parent=0 // loop_footer_branch
    %7 = sbr.rel target = $region3
  $region8: #{conv_layer_forward.2} parent=0 // loop_exit
    _

</llo_original>
